<compile_context>
chip_gen: v5e
topology: v5e:2x2
jax: 0.10.0
libtpu: 0.0.40
codegen_flags: <defaults>
</compile_context>

<pallas_src>
import math

import jax
import jax.numpy as jnp
from jax.experimental import pallas as pl
from jax.experimental.pallas import tpu as pltpu

LN_EPS = 1e-5
NEG_INF = -1e30


def _choose_tile(n, target):
    """Largest multiple-of-8 divisor of n that is <= target (falls back to n)."""
    if n <= target:
        return n
    t = (target // 8) * 8
    while t >= 8:
        if n % t == 0:
            return t
        t -= 8
    return n


def _layer_norm(x, g, b):
    m = jnp.mean(x, axis=-1, keepdims=True)
    v = jnp.mean(jnp.square(x - m), axis=-1, keepdims=True)
    return (x - m) * jax.lax.rsqrt(v + LN_EPS) * g + b


# --------------------------- kernel 1: LayerNorm1 + fused QKV ---------------------------
def ln_qkv_kernel(x_ref, wqkv_ref, bqkv_ref, ln1_ref, qkv_ref):
    x = x_ref[...].astype(jnp.float32)                             # (ts, D)
    xn = _layer_norm(x, ln1_ref[0], ln1_ref[1])
    qkv = jnp.dot(xn.astype(wqkv_ref.dtype), wqkv_ref[...],
                  preferred_element_type=jnp.float32) + bqkv_ref[0]
    qkv_ref[...] = qkv.astype(qkv_ref.dtype)                       # (ts, 3D), Q pre-scaled


def _ln_qkv_call(x2d, wqkv, bqkv, ln1, *, ts):
    N, D = x2d.shape
    D3 = wqkv.shape[1]
    return pl.pallas_call(
        ln_qkv_kernel,
        out_shape=jax.ShapeDtypeStruct((N, D3), x2d.dtype),
        grid=(N // ts,),
        in_specs=[
            pl.BlockSpec((ts, D), lambda i: (i, 0)),
            pl.BlockSpec(wqkv.shape, lambda i: (0, 0)),
            pl.BlockSpec(bqkv.shape, lambda i: (0, 0)),
            pl.BlockSpec(ln1.shape, lambda i: (0, 0)),
        ],
        out_specs=pl.BlockSpec((ts, D3), lambda i: (i, 0)),
        compiler_params=pltpu.CompilerParams(
            dimension_semantics=("parallel",)),
    )(x2d, wqkv, bqkv, ln1)


# ----------------------- kernel 2a: single-pass attention (KV fits one tile) -----------------------
def attn_single_kernel(q_ref, k_ref, v_ref, o_ref):
    q = q_ref[0]                                                   # (H, tq, dk), pre-scaled
    k = k_ref[0]                                                   # (H, S, dk)
    v = v_ref[0]                                                   # (H, S, dk)
    s = jnp.einsum("hqd,hkd->hqk", q, k, preferred_element_type=jnp.float32)
    # TODO(synk): attention mask path omitted (forward is exercised with mask=None).
    m = jnp.max(s, axis=-1, keepdims=True)
    p = jnp.exp(s - m)
    l = jnp.sum(p, axis=-1, keepdims=True)
    o = jnp.einsum("hqk,hkd->hqd", p.astype(v.dtype), v,
                   preferred_element_type=jnp.float32)
    o_ref[0] = (o * pl.reciprocal(l, approx=True)).astype(o_ref.dtype)


def _attn_single_call(q, k, v, *, tq):
    B, H, S, dk = q.shape
    return pl.pallas_call(
        attn_single_kernel,
        out_shape=jax.ShapeDtypeStruct((B, H, S, dk), q.dtype),
        grid=(B, S // tq),
        in_specs=[
            pl.BlockSpec((1, H, tq, dk), lambda b, qi: (b, 0, qi, 0)),
            pl.BlockSpec((1, H, S, dk), lambda b, qi: (b, 0, 0, 0)),
            pl.BlockSpec((1, H, S, dk), lambda b, qi: (b, 0, 0, 0)),
        ],
        out_specs=pl.BlockSpec((1, H, tq, dk), lambda b, qi: (b, 0, qi, 0)),
        compiler_params=pltpu.CompilerParams(
            dimension_semantics=("parallel", "parallel")),
    )(q, k, v)


# ----------------------- kernel 2b: head-batched flash attention (long KV) -----------------------
def flash_attn_kernel(q_ref, k_ref, v_ref, o_ref, m_sc, l_sc, acc_sc):
    ki = pl.program_id(2)

    @pl.when(ki == 0)
    def _():
        m_sc[...] = jnp.full(m_sc.shape, NEG_INF, dtype=m_sc.dtype)
        l_sc[...] = jnp.zeros(l_sc.shape, dtype=l_sc.dtype)
        acc_sc[...] = jnp.zeros(acc_sc.shape, dtype=acc_sc.dtype)

    q = q_ref[0]                                                   # (H, tq, dk), pre-scaled
    k = k_ref[0]                                                   # (H, tk, dk)
    s = jnp.einsum("hqd,hkd->hqk", q, k, preferred_element_type=jnp.float32)
    # TODO(synk): attention mask path omitted (forward is exercised with mask=None).

    m_prev = m_sc[...]
    m_new = jnp.maximum(m_prev, jnp.max(s, axis=-1, keepdims=True))
    alpha = jnp.exp(m_prev - m_new)
    p = jnp.exp(s - m_new)
    l_sc[...] = alpha * l_sc[...] + jnp.sum(p, axis=-1, keepdims=True)
    acc_sc[...] = alpha * acc_sc[...] + jnp.einsum(
        "hqk,hkd->hqd", p.astype(v_ref.dtype), v_ref[0],
        preferred_element_type=jnp.float32)
    m_sc[...] = m_new

    @pl.when(ki == pl.num_programs(2) - 1)
    def _():
        o_ref[0] = (acc_sc[...] * pl.reciprocal(l_sc[...], approx=True)
                    ).astype(o_ref.dtype)


def _flash_attn_call(q, k, v, *, tq, tk):
    B, H, S, dk = q.shape
    return pl.pallas_call(
        flash_attn_kernel,
        out_shape=jax.ShapeDtypeStruct((B, H, S, dk), q.dtype),
        grid=(B, S // tq, S // tk),
        in_specs=[
            pl.BlockSpec((1, H, tq, dk), lambda b, qi, ki: (b, 0, qi, 0)),
            pl.BlockSpec((1, H, tk, dk), lambda b, qi, ki: (b, 0, ki, 0)),
            pl.BlockSpec((1, H, tk, dk), lambda b, qi, ki: (b, 0, ki, 0)),
        ],
        out_specs=pl.BlockSpec((1, H, tq, dk), lambda b, qi, ki: (b, 0, qi, 0)),
        scratch_shapes=[
            pltpu.VMEM((H, tq, 1), jnp.float32),    # running max
            pltpu.VMEM((H, tq, 1), jnp.float32),    # running denom
            pltpu.VMEM((H, tq, dk), jnp.float32),   # running weighted sum
        ],
        compiler_params=pltpu.CompilerParams(
            dimension_semantics=("parallel", "parallel", "arbitrary")),
    )(q, k, v)


# ----------------- kernel 3: out-proj + residual + LayerNorm2 + FFN + residual -----------------
def out_ffn_kernel(x_ref, ctx_ref, wo_ref, bo_ref, w1_ref, b1_ref,
                   w2_ref, b2_ref, ln2_ref, o_ref):
    x = x_ref[...].astype(jnp.float32)                             # (ts, D)
    ctx = ctx_ref[...]
    x1 = x + jnp.dot(ctx.astype(wo_ref.dtype), wo_ref[...],
                     preferred_element_type=jnp.float32) + bo_ref[0]
    xn2 = _layer_norm(x1, ln2_ref[0], ln2_ref[1])
    h = jnp.maximum(
        jnp.dot(xn2.astype(w1_ref.dtype), w1_ref[...],
                preferred_element_type=jnp.float32) + b1_ref[0], 0.0)
    # TODO(synk): for very large d_ff, tile d_ff as a reduction grid axis with a
    # pl.when-guarded accumulator instead of materializing (ts, d_ff) in one shot.
    ff = jnp.dot(h.astype(w2_ref.dtype), w2_ref[...],
                 preferred_element_type=jnp.float32) + b2_ref[0]
    o_ref[...] = (x1 + ff).astype(o_ref.dtype)


def _out_ffn_call(x2d, ctx2d, wo, bo, w1, b1, w2, b2, ln2, *, ts):
    N, D = x2d.shape
    weights = (wo, bo, w1, b1, w2, b2, ln2)
    w_specs = [pl.BlockSpec(w.shape, lambda i: (0, 0)) for w in weights]
    return pl.pallas_call(
        out_ffn_kernel,
        out_shape=jax.ShapeDtypeStruct((N, D), x2d.dtype),
        grid=(N // ts,),
        in_specs=[pl.BlockSpec((ts, D), lambda i: (i, 0)),
                  pl.BlockSpec((ts, D), lambda i: (i, 0))] + w_specs,
        out_specs=pl.BlockSpec((ts, D), lambda i: (i, 0)),
        compiler_params=pltpu.CompilerParams(
            dimension_semantics=("parallel",)),
    )(x2d, ctx2d, *weights)


# --------------------------------- layer / encoder wrappers ---------------------------------
def encoder_layer_pallas(x, p, n_heads, *, row_tile=256, kv_tile=512):
    B, S, D = x.shape
    dk = D // n_heads
    N = B * S
    ts = _choose_tile(N, row_tile)     # row tile over flattened (B*S) rows
    tq = _choose_tile(S, row_tile)     # query tile for attention
    tk = _choose_tile(S, kv_tile)      # kv tile for the flash reduction axis

    x2d = x.reshape(N, D)
    qkv = _ln_qkv_call(x2d, p["wqkv"], p["bqkv"], p["ln1"], ts=ts)  # (N, 3D)

    # Wrapper-side layout plumbing (plain XLA): split heads to (B, H, S, dk).
    q, k, v = jnp.split(qkv.reshape(B, S, 3 * D), 3, axis=-1)

    def to_heads(t):
        return t.reshape(B, S, n_heads, dk).transpose(0, 2, 1, 3)

    if S <= tk:
        ctx = _attn_single_call(to_heads(q), to_heads(k), to_heads(v), tq=tq)
    else:
        ctx = _flash_attn_call(to_heads(q), to_heads(k), to_heads(v), tq=tq, tk=tk)
    ctx2d = ctx.transpose(0, 2, 1, 3).reshape(N, D)                # (N, D)

    out = _out_ffn_call(x2d, ctx2d, p["wo"], p["bo"], p["w1"], p["b1"],
                        p["w2"], p["b2"], p["ln2"], ts=ts)
    return out.reshape(B, S, D)


def encoder_pallas(x, layer_params, n_heads):
    # TODO(synk): cross-pallas_call prefetch (P10) of the next layer's weights would hide
    # each layer's weight cold-load; layers currently run as independent pallas_calls.
    for p in layer_params:
        x = encoder_layer_pallas(x, p, n_heads)
    return x


# ------------------------------------ parameter packing ------------------------------------
def pack_layer_params(raw, n_heads):
    """Fuse Q/K/V weights into one (D, 3D) matmul and pack LN params; fold the
    1/sqrt(d_k) attention scale into the Q weights/bias (one-time weight prep)."""
    D = raw["wq"].shape[0]
    scale = 1.0 / math.sqrt(D // n_heads)
    return {
        "wqkv": jnp.concatenate([raw["wq"] * scale, raw["wk"], raw["wv"]], axis=1),
        "bqkv": jnp.concatenate([raw["bq"] * scale, raw["bk"], raw["bv"]], axis=1),
        "wo": raw["wo"], "bo": raw["bo"],
        "w1": raw["w1"], "b1": raw["b1"],
        "w2": raw["w2"], "b2": raw["b2"],
        "ln1": jnp.concatenate([raw["g1"], raw["beta1"]], axis=0),   # (2, D)
        "ln2": jnp.concatenate([raw["g2"], raw["beta2"]], axis=0),   # (2, D)
    }


# ------------------------- pure-JAX reference (PyTorch semantics) -------------------------
def encoder_layer_ref(x, p, n_heads):
    B, S, D = x.shape
    d_k = D // n_heads

    def ln(z, g, b):
        m = z.mean(-1, keepdims=True)
        v = ((z - m) ** 2).mean(-1, keepdims=True)
        return (z - m) / jnp.sqrt(v + LN_EPS) * g + b

    xn = ln(x, p["g1"][0], p["beta1"][0])
    q = xn @ p["wq"] + p["bq"][0]
    k = xn @ p["wk"] + p["bk"][0]
    v = xn @ p["wv"] + p["bv"][0]

    def split(t):
        return t.reshape(B, S, n_heads, d_k).transpose(0, 2, 1, 3)

    qh, kh, vh = split(q), split(k), split(v)
    scores = jnp.einsum("bhqd,bhkd->bhqk", qh, kh) / math.sqrt(d_k)
    attn = jax.nn.softmax(scores, axis=-1)
    o = jnp.einsum("bhqk,bhkd->bhqd", attn, vh).transpose(0, 2, 1, 3).reshape(B, S, D)
    o = o @ p["wo"] + p["bo"][0]
    x1 = x + o
    xn2 = ln(x1, p["g2"][0], p["beta2"][0])
    ff = jnp.maximum(xn2 @ p["w1"] + p["b1"][0], 0.0) @ p["w2"] + p["b2"][0]
    return x1 + ff


def encoder_ref(x, layer_params, n_heads):
    for p in layer_params:
        x = encoder_layer_ref(x, p, n_heads)
    return x


# ------------------------------- deterministic param init -------------------------------
def init_layer_params(key, d_model, d_ff):
    ks = jax.random.split(key, 12)

    def lin_w(k, fan_in, fan_out):
        bound = 1.0 / math.sqrt(fan_in)
        return jax.random.uniform(k, (fan_in, fan_out), jnp.float32, -bound, bound)

    def lin_b(k, fan_in, fan_out):
        bound = 1.0 / math.sqrt(fan_in)
        return jax.random.uniform(k, (1, fan_out), jnp.float32, -bound, bound)

    return {
        "wq": lin_w(ks[0], d_model, d_model), "bq": lin_b(ks[1], d_model, d_model),
        "wk": lin_w(ks[2], d_model, d_model), "bk": lin_b(ks[3], d_model, d_model),
        "wv": lin_w(ks[4], d_model, d_model), "bv": lin_b(ks[5], d_model, d_model),
        "wo": lin_w(ks[6], d_model, d_model), "bo": lin_b(ks[7], d_model, d_model),
        "w1": lin_w(ks[8], d_model, d_ff),    "b1": lin_b(ks[9], d_model, d_ff),
        "w2": lin_w(ks[10], d_ff, d_model),   "b2": lin_b(ks[11], d_ff, d_model),
        "g1": jnp.ones((1, d_model), jnp.float32), "beta1": jnp.zeros((1, d_model), jnp.float32),
        "g2": jnp.ones((1, d_model), jnp.float32), "beta2": jnp.zeros((1, d_model), jnp.float32),
    }


if __name__ == "__main__":
    d_model, n_heads, d_ff, num_layers = 32, 4, 64, 2
    B, S = 2, 8

    key = jax.random.PRNGKey(0)
    k_src, k_par = jax.random.split(key)
    src = jax.random.normal(k_src, (B, S, d_model), jnp.float32)
    raw_params = [init_layer_params(jax.random.fold_in(k_par, i), d_model, d_ff)
                  for i in range(num_layers)]
    packed_params = [pack_layer_params(p, n_heads) for p in raw_params]

    run = jax.jit(encoder_pallas, static_argnames=("n_heads",))
    out = run(src, packed_params, n_heads=n_heads)
    out = jax.block_until_ready(out)

    ref = encoder_ref(src, raw_params, n_heads)
    assert out.shape == (B, S, d_model)
    # approx reciprocal in the softmax denominator → ~1e-3 relative tolerance
    assert jnp.allclose(out, ref, atol=2e-3, rtol=2e-3), "mismatch vs reference"

    print("KERNEL_OK")
</pallas_src>

<mosaic_0001>
module attributes {stable_mosaic.version = 11 : i64} {
  func.func @ln_qkv_kernel(%arg0: i32, %arg1: memref<16x32xf32, #tpu.memory_space<vmem>>, %arg2: memref<32x96xf32, #tpu.memory_space<vmem>>, %arg3: memref<1x96xf32, #tpu.memory_space<vmem>>, %arg4: memref<2x32xf32, #tpu.memory_space<vmem>>, %arg5: memref<16x96xf32, #tpu.memory_space<vmem>>) attributes {dimension_semantics = [#tpu.dimension_semantics<parallel>], iteration_bounds = array<i64: 1>, scalar_prefetch = 0 : i64, scratch_operands = 0 : i64, tpu.core_type = #tpu.core_type<tc>, window_params = [{transform_indices = @transform_0, window_bounds = array<i64: 16, 32>}, {pipeline_mode = #tpu.pipeline_mode<synchronous>, transform_indices = @transform_1, window_bounds = array<i64: 32, 96>}, {pipeline_mode = #tpu.pipeline_mode<synchronous>, transform_indices = @transform_2, window_bounds = array<i64: 1, 96>}, {pipeline_mode = #tpu.pipeline_mode<synchronous>, transform_indices = @transform_3, window_bounds = array<i64: 2, 32>}, {transform_indices = @transform_4, window_bounds = array<i64: 16, 96>}]} {
    %c0 = arith.constant 0 : index
    %c0_0 = arith.constant 0 : index
    %0 = vector.load %arg1[%c0, %c0_0] : memref<16x32xf32, #tpu.memory_space<vmem>>, vector<16x32xf32>
    %c0_1 = arith.constant 0 : index
    %c0_2 = arith.constant 0 : index
    %1 = vector.load %arg4[%c0_1, %c0_2] : memref<2x32xf32, #tpu.memory_space<vmem>>, vector<1x32xf32>
    %2 = vector.shape_cast %1 : vector<1x32xf32> to vector<32xf32>
    %c1 = arith.constant 1 : index
    %c0_3 = arith.constant 0 : index
    %3 = vector.load %arg4[%c1, %c0_3] : memref<2x32xf32, #tpu.memory_space<vmem>>, vector<1x32xf32>
    %4 = vector.shape_cast %3 : vector<1x32xf32> to vector<32xf32>
    %cst = arith.constant dense<0.000000e+00> : vector<16xf32>
    %5 = vector.multi_reduction <add>, %0, %cst [1] : vector<16x32xf32> to vector<16xf32>
    %6 = vector.shape_cast %5 : vector<16xf32> to vector<16x1xf32>
    %cst_4 = arith.constant 3.200000e+01 : f32
    %7 = vector.broadcast %cst_4 : f32 to vector<16x1xf32>
    %8 = arith.divf %6, %7 : vector<16x1xf32>
    %9 = vector.broadcast %8 : vector<16x1xf32> to vector<16x32xf32>
    %10 = arith.subf %0, %9 : vector<16x32xf32>
    %11 = arith.mulf %10, %10 : vector<16x32xf32>
    %cst_5 = arith.constant dense<0.000000e+00> : vector<16xf32>
    %12 = vector.multi_reduction <add>, %11, %cst_5 [1] : vector<16x32xf32> to vector<16xf32>
    %13 = vector.shape_cast %12 : vector<16xf32> to vector<16x1xf32>
    %cst_6 = arith.constant 3.200000e+01 : f32
    %14 = vector.broadcast %cst_6 : f32 to vector<16x1xf32>
    %15 = arith.divf %13, %14 : vector<16x1xf32>
    %16 = vector.broadcast %8 : vector<16x1xf32> to vector<16x32xf32>
    %17 = arith.subf %0, %16 : vector<16x32xf32>
    %cst_7 = arith.constant 9.99999974E-6 : f32
    %18 = vector.broadcast %cst_7 : f32 to vector<16x1xf32>
    %19 = arith.addf %15, %18 : vector<16x1xf32>
    %20 = math.rsqrt %19 : vector<16x1xf32>
    %21 = vector.broadcast %20 : vector<16x1xf32> to vector<16x32xf32>
    %22 = arith.mulf %17, %21 : vector<16x32xf32>
    %23 = vector.shape_cast %2 : vector<32xf32> to vector<1x32xf32>
    %24 = vector.broadcast %23 : vector<1x32xf32> to vector<16x32xf32>
    %25 = arith.mulf %22, %24 : vector<16x32xf32>
    %26 = vector.shape_cast %4 : vector<32xf32> to vector<1x32xf32>
    %27 = vector.broadcast %26 : vector<1x32xf32> to vector<16x32xf32>
    %28 = arith.addf %25, %27 : vector<16x32xf32>
    %c0_8 = arith.constant 0 : index
    %c0_9 = arith.constant 0 : index
    %29 = vector.load %arg2[%c0_8, %c0_9] : memref<32x96xf32, #tpu.memory_space<vmem>>, vector<32x96xf32>
    %cst_10 = arith.constant dense<0.000000e+00> : vector<16x96xf32>
    %30 = tpu.matmul %28, %29, %cst_10 {dimension_numbers = #tpu.dot_dimension_numbers<[1], [0], [0], [1], [0, 0, 1, 1], [], []>} : vector<16x32xf32>, vector<32x96xf32>, vector<16x96xf32> -> vector<16x96xf32>
    %c0_11 = arith.constant 0 : index
    %c0_12 = arith.constant 0 : index
    %31 = vector.load %arg3[%c0_11, %c0_12] : memref<1x96xf32, #tpu.memory_space<vmem>>, vector<1x96xf32>
    %32 = vector.shape_cast %31 : vector<1x96xf32> to vector<96xf32>
    %33 = vector.shape_cast %32 : vector<96xf32> to vector<1x96xf32>
    %34 = vector.broadcast %33 : vector<1x96xf32> to vector<16x96xf32>
    %35 = arith.addf %30, %34 : vector<16x96xf32>
    %c0_13 = arith.constant 0 : index
    %c0_14 = arith.constant 0 : index
    %36 = vector.load %arg5[%c0_13, %c0_14] : memref<16x96xf32, #tpu.memory_space<vmem>>, vector<16x96xf32>
    tpu.vector_store %arg5[%c0_13, %c0_14], %35 {strides = array<i32>} : memref<16x96xf32, #tpu.memory_space<vmem>>, vector<16x96xf32>,
    return
  }
  func.func @transform_0(%arg0: i32) -> (i32, i32) {
    %c0_i32 = arith.constant 0 : i32
    %c0_i32_0 = arith.constant 0 : i32
    return %arg0, %c0_i32 : i32, i32
  }
  func.func @transform_1(%arg0: i32) -> (i32, i32) {
    %c0_i32 = arith.constant 0 : i32
    %c0_i32_0 = arith.constant 0 : i32
    %c0_i32_1 = arith.constant 0 : i32
    return %c0_i32, %c0_i32_0 : i32, i32
  }
  func.func @transform_2(%arg0: i32) -> (i32, i32) {
    %c0_i32 = arith.constant 0 : i32
    %c0_i32_0 = arith.constant 0 : i32
    %c0_i32_1 = arith.constant 0 : i32
    return %c0_i32, %c0_i32_0 : i32, i32
  }
  func.func @transform_3(%arg0: i32) -> (i32, i32) {
    %c0_i32 = arith.constant 0 : i32
    %c0_i32_0 = arith.constant 0 : i32
    %c0_i32_1 = arith.constant 0 : i32
    return %c0_i32, %c0_i32_0 : i32, i32
  }
  func.func @transform_4(%arg0: i32) -> (i32, i32) {
    %c0_i32 = arith.constant 0 : i32
    %c0_i32_0 = arith.constant 0 : i32
    return %arg0, %c0_i32 : i32, i32
  }
}

module attributes {stable_mosaic.version = 11 : i64} {
  func.func @attn_single_kernel(%arg0: i32, %arg1: i32, %arg2: memref<1x4x8x8xf32, #tpu.memory_space<vmem>>, %arg3: memref<1x4x8x8xf32, #tpu.memory_space<vmem>>, %arg4: memref<1x4x8x8xf32, #tpu.memory_space<vmem>>, %arg5: memref<1x4x8x8xf32, #tpu.memory_space<vmem>>) attributes {dimension_semantics = [#tpu.dimension_semantics<parallel>, #tpu.dimension_semantics<parallel>], iteration_bounds = array<i64: 2, 1>, scalar_prefetch = 0 : i64, scratch_operands = 0 : i64, tpu.core_type = #tpu.core_type<tc>, window_params = [{transform_indices = @transform_0, window_bounds = array<i64: 1, 4, 8, 8>}, {transform_indices = @transform_1, window_bounds = array<i64: 1, 4, 8, 8>}, {transform_indices = @transform_2, window_bounds = array<i64: 1, 4, 8, 8>}, {transform_indices = @transform_3, window_bounds = array<i64: 1, 4, 8, 8>}]} {
    %c0 = arith.constant 0 : index
    %c0_0 = arith.constant 0 : index
    %c0_1 = arith.constant 0 : index
    %c0_2 = arith.constant 0 : index
    %0 = vector.load %arg2[%c0, %c0_0, %c0_1, %c0_2] : memref<1x4x8x8xf32, #tpu.memory_space<vmem>>, vector<1x4x8x8xf32>
    %1 = vector.shape_cast %0 : vector<1x4x8x8xf32> to vector<4x8x8xf32>
    %c0_3 = arith.constant 0 : index
    %c0_4 = arith.constant 0 : index
    %c0_5 = arith.constant 0 : index
    %c0_6 = arith.constant 0 : index
    %2 = vector.load %arg3[%c0_3, %c0_4, %c0_5, %c0_6] : memref<1x4x8x8xf32, #tpu.memory_space<vmem>>, vector<1x4x8x8xf32>
    %3 = vector.shape_cast %2 : vector<1x4x8x8xf32> to vector<4x8x8xf32>
    %c0_7 = arith.constant 0 : index
    %c0_8 = arith.constant 0 : index
    %c0_9 = arith.constant 0 : index
    %c0_10 = arith.constant 0 : index
    %4 = vector.load %arg4[%c0_7, %c0_8, %c0_9, %c0_10] : memref<1x4x8x8xf32, #tpu.memory_space<vmem>>, vector<1x4x8x8xf32>
    %5 = vector.shape_cast %4 : vector<1x4x8x8xf32> to vector<4x8x8xf32>
    "tpu.trace_start"() <{level = 10 : i32, message = "hqd,hkd->hqk"}> : () -> ()
    %cst = arith.constant dense<0.000000e+00> : vector<4x8x8xf32>
    %6 = tpu.matmul %1, %3, %cst {dimension_numbers = #tpu.dot_dimension_numbers<[2], [2], [1], [1], [0, 0, 0, 1, 1, 1], [0], [0]>} : vector<4x8x8xf32>, vector<4x8x8xf32>, vector<4x8x8xf32> -> vector<4x8x8xf32>
    "tpu.trace_stop"() : () -> ()
    %cst_11 = arith.constant dense<0xFF800000> : vector<4x8xf32>
    %7 = vector.multi_reduction <maximumf>, %6, %cst_11 [2] : vector<4x8x8xf32> to vector<4x8xf32>
    %8 = vector.shape_cast %7 : vector<4x8xf32> to vector<4x8x1xf32>
    %9 = vector.broadcast %8 : vector<4x8x1xf32> to vector<4x8x8xf32>
    %10 = arith.subf %6, %9 : vector<4x8x8xf32>
    %11 = math.exp %10 : vector<4x8x8xf32>
    %cst_12 = arith.constant dense<0.000000e+00> : vector<4x8xf32>
    %12 = vector.multi_reduction <add>, %11, %cst_12 [2] : vector<4x8x8xf32> to vector<4x8xf32>
    %13 = vector.shape_cast %12 : vector<4x8xf32> to vector<4x8x1xf32>
    "tpu.trace_start"() <{level = 10 : i32, message = "hqk,hkd->hqd"}> : () -> ()
    %cst_13 = arith.constant dense<0.000000e+00> : vector<4x8x8xf32>
    %14 = tpu.matmul %11, %5, %cst_13 {dimension_numbers = #tpu.dot_dimension_numbers<[2], [1], [1], [2], [0, 0, 0, 1, 1, 2], [0], [0]>} : vector<4x8x8xf32>, vector<4x8x8xf32>, vector<4x8x8xf32> -> vector<4x8x8xf32>
    "tpu.trace_stop"() : () -> ()
    %15 = tpu.reciprocal %13 {approx = true} : vector<4x8x1xf32> -> vector<4x8x1xf32>
    %16 = vector.broadcast %15 : vector<4x8x1xf32> to vector<4x8x8xf32>
    %17 = arith.mulf %14, %16 : vector<4x8x8xf32>
    %c0_14 = arith.constant 0 : index
    %c0_15 = arith.constant 0 : index
    %c0_16 = arith.constant 0 : index
    %c0_17 = arith.constant 0 : index
    %18 = vector.load %arg5[%c0_14, %c0_15, %c0_16, %c0_17] : memref<1x4x8x8xf32, #tpu.memory_space<vmem>>, vector<1x4x8x8xf32>
    %19 = vector.shape_cast %18 : vector<1x4x8x8xf32> to vector<4x8x8xf32>
    %20 = vector.shape_cast %17 : vector<4x8x8xf32> to vector<1x4x8x8xf32>
    tpu.vector_store %arg5[%c0_14, %c0_15, %c0_16, %c0_17], %20 {strides = array<i32>} : memref<1x4x8x8xf32, #tpu.memory_space<vmem>>, vector<1x4x8x8xf32>,
    return
  }
  func.func @transform_0(%arg0: i32, %arg1: i32) -> (i32, i32, i32, i32) {
    %c0_i32 = arith.constant 0 : i32
    %c0_i32_0 = arith.constant 0 : i32
    %c0_i32_1 = arith.constant 0 : i32
    return %arg0, %c0_i32, %arg1, %c0_i32_0 : i32, i32, i32, i32
  }
  func.func @transform_1(%arg0: i32, %arg1: i32) -> (i32, i32, i32, i32) {
    %c0_i32 = arith.constant 0 : i32
    %c0_i32_0 = arith.constant 0 : i32
    %c0_i32_1 = arith.constant 0 : i32
    %c0_i32_2 = arith.constant 0 : i32
    return %arg0, %c0_i32, %c0_i32_0, %c0_i32_1 : i32, i32, i32, i32
  }
  func.func @transform_2(%arg0: i32, %arg1: i32) -> (i32, i32, i32, i32) {
    %c0_i32 = arith.constant 0 : i32
    %c0_i32_0 = arith.constant 0 : i32
    %c0_i32_1 = arith.constant 0 : i32
    %c0_i32_2 = arith.constant 0 : i32
    return %arg0, %c0_i32, %c0_i32_0, %c0_i32_1 : i32, i32, i32, i32
  }
  func.func @transform_3(%arg0: i32, %arg1: i32) -> (i32, i32, i32, i32) {
    %c0_i32 = arith.constant 0 : i32
    %c0_i32_0 = arith.constant 0 : i32
    %c0_i32_1 = arith.constant 0 : i32
    return %arg0, %c0_i32, %arg1, %c0_i32_0 : i32, i32, i32, i32
  }
}

module attributes {stable_mosaic.version = 11 : i64} {
  func.func @out_ffn_kernel(%arg0: i32, %arg1: memref<16x32xf32, #tpu.memory_space<vmem>>, %arg2: memref<16x32xf32, #tpu.memory_space<vmem>>, %arg3: memref<32x32xf32, #tpu.memory_space<vmem>>, %arg4: memref<1x32xf32, #tpu.memory_space<vmem>>, %arg5: memref<32x64xf32, #tpu.memory_space<vmem>>, %arg6: memref<1x64xf32, #tpu.memory_space<vmem>>, %arg7: memref<64x32xf32, #tpu.memory_space<vmem>>, %arg8: memref<1x32xf32, #tpu.memory_space<vmem>>, %arg9: memref<2x32xf32, #tpu.memory_space<vmem>>, %arg10: memref<16x32xf32, #tpu.memory_space<vmem>>) attributes {dimension_semantics = [#tpu.dimension_semantics<parallel>], iteration_bounds = array<i64: 1>, scalar_prefetch = 0 : i64, scratch_operands = 0 : i64, tpu.core_type = #tpu.core_type<tc>, window_params = [{transform_indices = @transform_0, window_bounds = array<i64: 16, 32>}, {transform_indices = @transform_1, window_bounds = array<i64: 16, 32>}, {pipeline_mode = #tpu.pipeline_mode<synchronous>, transform_indices = @transform_2, window_bounds = array<i64: 32, 32>}, {pipeline_mode = #tpu.pipeline_mode<synchronous>, transform_indices = @transform_3, window_bounds = array<i64: 1, 32>}, {pipeline_mode = #tpu.pipeline_mode<synchronous>, transform_indices = @transform_4, window_bounds = array<i64: 32, 64>}, {pipeline_mode = #tpu.pipeline_mode<synchronous>, transform_indices = @transform_5, window_bounds = array<i64: 1, 64>}, {pipeline_mode = #tpu.pipeline_mode<synchronous>, transform_indices = @transform_6, window_bounds = array<i64: 64, 32>}, {pipeline_mode = #tpu.pipeline_mode<synchronous>, transform_indices = @transform_7, window_bounds = array<i64: 1, 32>}, {pipeline_mode = #tpu.pipeline_mode<synchronous>, transform_indices = @transform_8, window_bounds = array<i64: 2, 32>}, {transform_indices = @transform_9, window_bounds = array<i64: 16, 32>}]} {
    %c0 = arith.constant 0 : index
    %c0_0 = arith.constant 0 : index
    %0 = vector.load %arg1[%c0, %c0_0] : memref<16x32xf32, #tpu.memory_space<vmem>>, vector<16x32xf32>
    %c0_1 = arith.constant 0 : index
    %c0_2 = arith.constant 0 : index
    %1 = vector.load %arg2[%c0_1, %c0_2] : memref<16x32xf32, #tpu.memory_space<vmem>>, vector<16x32xf32>
    %c0_3 = arith.constant 0 : index
    %c0_4 = arith.constant 0 : index
    %2 = vector.load %arg3[%c0_3, %c0_4] : memref<32x32xf32, #tpu.memory_space<vmem>>, vector<32x32xf32>
    %cst = arith.constant dense<0.000000e+00> : vector<16x32xf32>
    %3 = tpu.matmul %1, %2, %cst {dimension_numbers = #tpu.dot_dimension_numbers<[1], [0], [0], [1], [0, 0, 1, 1], [], []>} : vector<16x32xf32>, vector<32x32xf32>, vector<16x32xf32> -> vector<16x32xf32>
    %4 = arith.addf %0, %3 : vector<16x32xf32>
    %c0_5 = arith.constant 0 : index
    %c0_6 = arith.constant 0 : index
    %5 = vector.load %arg4[%c0_5, %c0_6] : memref<1x32xf32, #tpu.memory_space<vmem>>, vector<1x32xf32>
    %6 = vector.shape_cast %5 : vector<1x32xf32> to vector<32xf32>
    %7 = vector.shape_cast %6 : vector<32xf32> to vector<1x32xf32>
    %8 = vector.broadcast %7 : vector<1x32xf32> to vector<16x32xf32>
    %9 = arith.addf %4, %8 : vector<16x32xf32>
    %c0_7 = arith.constant 0 : index
    %c0_8 = arith.constant 0 : index
    %10 = vector.load %arg9[%c0_7, %c0_8] : memref<2x32xf32, #tpu.memory_space<vmem>>, vector<1x32xf32>
    %11 = vector.shape_cast %10 : vector<1x32xf32> to vector<32xf32>
    %c1 = arith.constant 1 : index
    %c0_9 = arith.constant 0 : index
    %12 = vector.load %arg9[%c1, %c0_9] : memref<2x32xf32, #tpu.memory_space<vmem>>, vector<1x32xf32>
    %13 = vector.shape_cast %12 : vector<1x32xf32> to vector<32xf32>
    %cst_10 = arith.constant dense<0.000000e+00> : vector<16xf32>
    %14 = vector.multi_reduction <add>, %9, %cst_10 [1] : vector<16x32xf32> to vector<16xf32>
    %15 = vector.shape_cast %14 : vector<16xf32> to vector<16x1xf32>
    %cst_11 = arith.constant 3.200000e+01 : f32
    %16 = vector.broadcast %cst_11 : f32 to vector<16x1xf32>
    %17 = arith.divf %15, %16 : vector<16x1xf32>
    %18 = vector.broadcast %17 : vector<16x1xf32> to vector<16x32xf32>
    %19 = arith.subf %9, %18 : vector<16x32xf32>
    %20 = arith.mulf %19, %19 : vector<16x32xf32>
    %cst_12 = arith.constant dense<0.000000e+00> : vector<16xf32>
    %21 = vector.multi_reduction <add>, %20, %cst_12 [1] : vector<16x32xf32> to vector<16xf32>
    %22 = vector.shape_cast %21 : vector<16xf32> to vector<16x1xf32>
    %cst_13 = arith.constant 3.200000e+01 : f32
    %23 = vector.broadcast %cst_13 : f32 to vector<16x1xf32>
    %24 = arith.divf %22, %23 : vector<16x1xf32>
    %25 = vector.broadcast %17 : vector<16x1xf32> to vector<16x32xf32>
    %26 = arith.subf %9, %25 : vector<16x32xf32>
    %cst_14 = arith.constant 9.99999974E-6 : f32
    %27 = vector.broadcast %cst_14 : f32 to vector<16x1xf32>
    %28 = arith.addf %24, %27 : vector<16x1xf32>
    %29 = math.rsqrt %28 : vector<16x1xf32>
    %30 = vector.broadcast %29 : vector<16x1xf32> to vector<16x32xf32>
    %31 = arith.mulf %26, %30 : vector<16x32xf32>
    %32 = vector.shape_cast %11 : vector<32xf32> to vector<1x32xf32>
    %33 = vector.broadcast %32 : vector<1x32xf32> to vector<16x32xf32>
    %34 = arith.mulf %31, %33 : vector<16x32xf32>
    %35 = vector.shape_cast %13 : vector<32xf32> to vector<1x32xf32>
    %36 = vector.broadcast %35 : vector<1x32xf32> to vector<16x32xf32>
    %37 = arith.addf %34, %36 : vector<16x32xf32>
    %c0_15 = arith.constant 0 : index
    %c0_16 = arith.constant 0 : index
    %38 = vector.load %arg5[%c0_15, %c0_16] : memref<32x64xf32, #tpu.memory_space<vmem>>, vector<32x64xf32>
    %cst_17 = arith.constant dense<0.000000e+00> : vector<16x64xf32>
    %39 = tpu.matmul %37, %38, %cst_17 {dimension_numbers = #tpu.dot_dimension_numbers<[1], [0], [0], [1], [0, 0, 1, 1], [], []>} : vector<16x32xf32>, vector<32x64xf32>, vector<16x64xf32> -> vector<16x64xf32>
    %c0_18 = arith.constant 0 : index
    %c0_19 = arith.constant 0 : index
    %40 = vector.load %arg6[%c0_18, %c0_19] : memref<1x64xf32, #tpu.memory_space<vmem>>, vector<1x64xf32>
    %41 = vector.shape_cast %40 : vector<1x64xf32> to vector<64xf32>
    %42 = vector.shape_cast %41 : vector<64xf32> to vector<1x64xf32>
    %43 = vector.broadcast %42 : vector<1x64xf32> to vector<16x64xf32>
    %44 = arith.addf %39, %43 : vector<16x64xf32>
    %cst_20 = arith.constant 0.000000e+00 : f32
    %45 = vector.broadcast %cst_20 : f32 to vector<16x64xf32>
    %46 = arith.maximumf %44, %45 : vector<16x64xf32>
    %c0_21 = arith.constant 0 : index
    %c0_22 = arith.constant 0 : index
    %47 = vector.load %arg7[%c0_21, %c0_22] : memref<64x32xf32, #tpu.memory_space<vmem>>, vector<64x32xf32>
    %cst_23 = arith.constant dense<0.000000e+00> : vector<16x32xf32>
    %48 = tpu.matmul %46, %47, %cst_23 {dimension_numbers = #tpu.dot_dimension_numbers<[1], [0], [0], [1], [0, 0, 1, 1], [], []>} : vector<16x64xf32>, vector<64x32xf32>, vector<16x32xf32> -> vector<16x32xf32>
    %c0_24 = arith.constant 0 : index
    %c0_25 = arith.constant 0 : index
    %49 = vector.load %arg8[%c0_24, %c0_25] : memref<1x32xf32, #tpu.memory_space<vmem>>, vector<1x32xf32>
    %50 = vector.shape_cast %49 : vector<1x32xf32> to vector<32xf32>
    %51 = vector.shape_cast %50 : vector<32xf32> to vector<1x32xf32>
    %52 = vector.broadcast %51 : vector<1x32xf32> to vector<16x32xf32>
    %53 = arith.addf %48, %52 : vector<16x32xf32>
    %54 = arith.addf %9, %53 : vector<16x32xf32>
    %c0_26 = arith.constant 0 : index
    %c0_27 = arith.constant 0 : index
    %55 = vector.load %arg10[%c0_26, %c0_27] : memref<16x32xf32, #tpu.memory_space<vmem>>, vector<16x32xf32>
    tpu.vector_store %arg10[%c0_26, %c0_27], %54 {strides = array<i32>} : memref<16x32xf32, #tpu.memory_space<vmem>>, vector<16x32xf32>,
    return
  }
  func.func @transform_0(%arg0: i32) -> (i32, i32) {
    %c0_i32 = arith.constant 0 : i32
    %c0_i32_0 = arith.constant 0 : i32
    return %arg0, %c0_i32 : i32, i32
  }
  func.func @transform_1(%arg0: i32) -> (i32, i32) {
    %c0_i32 = arith.constant 0 : i32
    %c0_i32_0 = arith.constant 0 : i32
    return %arg0, %c0_i32 : i32, i32
  }
  func.func @transform_2(%arg0: i32) -> (i32, i32) {
    %c0_i32 = arith.constant 0 : i32
    %c0_i32_0 = arith.constant 0 : i32
    %c0_i32_1 = arith.constant 0 : i32
    return %c0_i32, %c0_i32_0 : i32, i32
  }
  func.func @transform_3(%arg0: i32) -> (i32, i32) {
    %c0_i32 = arith.constant 0 : i32
    %c0_i32_0 = arith.constant 0 : i32
    %c0_i32_1 = arith.constant 0 : i32
    return %c0_i32, %c0_i32_0 : i32, i32
  }
  func.func @transform_4(%arg0: i32) -> (i32, i32) {
    %c0_i32 = arith.constant 0 : i32
    %c0_i32_0 = arith.constant 0 : i32
    %c0_i32_1 = arith.constant 0 : i32
    return %c0_i32, %c0_i32_0 : i32, i32
  }
  func.func @transform_5(%arg0: i32) -> (i32, i32) {
    %c0_i32 = arith.constant 0 : i32
    %c0_i32_0 = arith.constant 0 : i32
    %c0_i32_1 = arith.constant 0 : i32
    return %c0_i32, %c0_i32_0 : i32, i32
  }
  func.func @transform_6(%arg0: i32) -> (i32, i32) {
    %c0_i32 = arith.constant 0 : i32
    %c0_i32_0 = arith.constant 0 : i32
    %c0_i32_1 = arith.constant 0 : i32
    return %c0_i32, %c0_i32_0 : i32, i32
  }
  func.func @transform_7(%arg0: i32) -> (i32, i32) {
    %c0_i32 = arith.constant 0 : i32
    %c0_i32_0 = arith.constant 0 : i32
    %c0_i32_1 = arith.constant 0 : i32
    return %c0_i32, %c0_i32_0 : i32, i32
  }
  func.func @transform_8(%arg0: i32) -> (i32, i32) {
    %c0_i32 = arith.constant 0 : i32
    %c0_i32_0 = arith.constant 0 : i32
    %c0_i32_1 = arith.constant 0 : i32
    return %c0_i32, %c0_i32_0 : i32, i32
  }
  func.func @transform_9(%arg0: i32) -> (i32, i32) {
    %c0_i32 = arith.constant 0 : i32
    %c0_i32_0 = arith.constant 0 : i32
    return %arg0, %c0_i32 : i32, i32
  }
}

module attributes {stable_mosaic.version = 11 : i64} {
  func.func @ln_qkv_kernel(%arg0: i32, %arg1: memref<16x32xf32, #tpu.memory_space<vmem>>, %arg2: memref<32x96xf32, #tpu.memory_space<vmem>>, %arg3: memref<1x96xf32, #tpu.memory_space<vmem>>, %arg4: memref<2x32xf32, #tpu.memory_space<vmem>>, %arg5: memref<16x96xf32, #tpu.memory_space<vmem>>) attributes {dimension_semantics = [#tpu.dimension_semantics<parallel>], iteration_bounds = array<i64: 1>, scalar_prefetch = 0 : i64, scratch_operands = 0 : i64, tpu.core_type = #tpu.core_type<tc>, window_params = [{transform_indices = @transform_0, window_bounds = array<i64: 16, 32>}, {pipeline_mode = #tpu.pipeline_mode<synchronous>, transform_indices = @transform_1, window_bounds = array<i64: 32, 96>}, {pipeline_mode = #tpu.pipeline_mode<synchronous>, transform_indices = @transform_2, window_bounds = array<i64: 1, 96>}, {pipeline_mode = #tpu.pipeline_mode<synchronous>, transform_indices = @transform_3, window_bounds = array<i64: 2, 32>}, {transform_indices = @transform_4, window_bounds = array<i64: 16, 96>}]} {
    %c0 = arith.constant 0 : index
    %c0_0 = arith.constant 0 : index
    %0 = vector.load %arg1[%c0, %c0_0] : memref<16x32xf32, #tpu.memory_space<vmem>>, vector<16x32xf32>
    %c0_1 = arith.constant 0 : index
    %c0_2 = arith.constant 0 : index
    %1 = vector.load %arg4[%c0_1, %c0_2] : memref<2x32xf32, #tpu.memory_space<vmem>>, vector<1x32xf32>
    %2 = vector.shape_cast %1 : vector<1x32xf32> to vector<32xf32>
    %c1 = arith.constant 1 : index
    %c0_3 = arith.constant 0 : index
    %3 = vector.load %arg4[%c1, %c0_3] : memref<2x32xf32, #tpu.memory_space<vmem>>, vector<1x32xf32>
    %4 = vector.shape_cast %3 : vector<1x32xf32> to vector<32xf32>
    %cst = arith.constant dense<0.000000e+00> : vector<16xf32>
    %5 = vector.multi_reduction <add>, %0, %cst [1] : vector<16x32xf32> to vector<16xf32>
    %6 = vector.shape_cast %5 : vector<16xf32> to vector<16x1xf32>
    %cst_4 = arith.constant 3.200000e+01 : f32
    %7 = vector.broadcast %cst_4 : f32 to vector<16x1xf32>
    %8 = arith.divf %6, %7 : vector<16x1xf32>
    %9 = vector.broadcast %8 : vector<16x1xf32> to vector<16x32xf32>
    %10 = arith.subf %0, %9 : vector<16x32xf32>
    %11 = arith.mulf %10, %10 : vector<16x32xf32>
    %cst_5 = arith.constant dense<0.000000e+00> : vector<16xf32>
    %12 = vector.multi_reduction <add>, %11, %cst_5 [1] : vector<16x32xf32> to vector<16xf32>
    %13 = vector.shape_cast %12 : vector<16xf32> to vector<16x1xf32>
    %cst_6 = arith.constant 3.200000e+01 : f32
    %14 = vector.broadcast %cst_6 : f32 to vector<16x1xf32>
    %15 = arith.divf %13, %14 : vector<16x1xf32>
    %16 = vector.broadcast %8 : vector<16x1xf32> to vector<16x32xf32>
    %17 = arith.subf %0, %16 : vector<16x32xf32>
    %cst_7 = arith.constant 9.99999974E-6 : f32
    %18 = vector.broadcast %cst_7 : f32 to vector<16x1xf32>
    %19 = arith.addf %15, %18 : vector<16x1xf32>
    %20 = math.rsqrt %19 : vector<16x1xf32>
    %21 = vector.broadcast %20 : vector<16x1xf32> to vector<16x32xf32>
    %22 = arith.mulf %17, %21 : vector<16x32xf32>
    %23 = vector.shape_cast %2 : vector<32xf32> to vector<1x32xf32>
    %24 = vector.broadcast %23 : vector<1x32xf32> to vector<16x32xf32>
    %25 = arith.mulf %22, %24 : vector<16x32xf32>
    %26 = vector.shape_cast %4 : vector<32xf32> to vector<1x32xf32>
    %27 = vector.broadcast %26 : vector<1x32xf32> to vector<16x32xf32>
    %28 = arith.addf %25, %27 : vector<16x32xf32>
    %c0_8 = arith.constant 0 : index
    %c0_9 = arith.constant 0 : index
    %29 = vector.load %arg2[%c0_8, %c0_9] : memref<32x96xf32, #tpu.memory_space<vmem>>, vector<32x96xf32>
    %cst_10 = arith.constant dense<0.000000e+00> : vector<16x96xf32>
    %30 = tpu.matmul %28, %29, %cst_10 {dimension_numbers = #tpu.dot_dimension_numbers<[1], [0], [0], [1], [0, 0, 1, 1], [], []>} : vector<16x32xf32>, vector<32x96xf32>, vector<16x96xf32> -> vector<16x96xf32>
    %c0_11 = arith.constant 0 : index
    %c0_12 = arith.constant 0 : index
    %31 = vector.load %arg3[%c0_11, %c0_12] : memref<1x96xf32, #tpu.memory_space<vmem>>, vector<1x96xf32>
    %32 = vector.shape_cast %31 : vector<1x96xf32> to vector<96xf32>
    %33 = vector.shape_cast %32 : vector<96xf32> to vector<1x96xf32>
    %34 = vector.broadcast %33 : vector<1x96xf32> to vector<16x96xf32>
    %35 = arith.addf %30, %34 : vector<16x96xf32>
    %c0_13 = arith.constant 0 : index
    %c0_14 = arith.constant 0 : index
    %36 = vector.load %arg5[%c0_13, %c0_14] : memref<16x96xf32, #tpu.memory_space<vmem>>, vector<16x96xf32>
    tpu.vector_store %arg5[%c0_13, %c0_14], %35 {strides = array<i32>} : memref<16x96xf32, #tpu.memory_space<vmem>>, vector<16x96xf32>,
    return
  }
  func.func @transform_0(%arg0: i32) -> (i32, i32) {
    %c0_i32 = arith.constant 0 : i32
    %c0_i32_0 = arith.constant 0 : i32
    return %arg0, %c0_i32 : i32, i32
  }
  func.func @transform_1(%arg0: i32) -> (i32, i32) {
    %c0_i32 = arith.constant 0 : i32
    %c0_i32_0 = arith.constant 0 : i32
    %c0_i32_1 = arith.constant 0 : i32
    return %c0_i32, %c0_i32_0 : i32, i32
  }
  func.func @transform_2(%arg0: i32) -> (i32, i32) {
    %c0_i32 = arith.constant 0 : i32
    %c0_i32_0 = arith.constant 0 : i32
    %c0_i32_1 = arith.constant 0 : i32
    return %c0_i32, %c0_i32_0 : i32, i32
  }
  func.func @transform_3(%arg0: i32) -> (i32, i32) {
    %c0_i32 = arith.constant 0 : i32
    %c0_i32_0 = arith.constant 0 : i32
    %c0_i32_1 = arith.constant 0 : i32
    return %c0_i32, %c0_i32_0 : i32, i32
  }
  func.func @transform_4(%arg0: i32) -> (i32, i32) {
    %c0_i32 = arith.constant 0 : i32
    %c0_i32_0 = arith.constant 0 : i32
    return %arg0, %c0_i32 : i32, i32
  }
}

module attributes {stable_mosaic.version = 11 : i64} {
  func.func @out_ffn_kernel(%arg0: i32, %arg1: memref<16x32xf32, #tpu.memory_space<vmem>>, %arg2: memref<16x32xf32, #tpu.memory_space<vmem>>, %arg3: memref<32x32xf32, #tpu.memory_space<vmem>>, %arg4: memref<1x32xf32, #tpu.memory_space<vmem>>, %arg5: memref<32x64xf32, #tpu.memory_space<vmem>>, %arg6: memref<1x64xf32, #tpu.memory_space<vmem>>, %arg7: memref<64x32xf32, #tpu.memory_space<vmem>>, %arg8: memref<1x32xf32, #tpu.memory_space<vmem>>, %arg9: memref<2x32xf32, #tpu.memory_space<vmem>>, %arg10: memref<16x32xf32, #tpu.memory_space<vmem>>) attributes {dimension_semantics = [#tpu.dimension_semantics<parallel>], iteration_bounds = array<i64: 1>, scalar_prefetch = 0 : i64, scratch_operands = 0 : i64, tpu.core_type = #tpu.core_type<tc>, window_params = [{transform_indices = @transform_0, window_bounds = array<i64: 16, 32>}, {transform_indices = @transform_1, window_bounds = array<i64: 16, 32>}, {pipeline_mode = #tpu.pipeline_mode<synchronous>, transform_indices = @transform_2, window_bounds = array<i64: 32, 32>}, {pipeline_mode = #tpu.pipeline_mode<synchronous>, transform_indices = @transform_3, window_bounds = array<i64: 1, 32>}, {pipeline_mode = #tpu.pipeline_mode<synchronous>, transform_indices = @transform_4, window_bounds = array<i64: 32, 64>}, {pipeline_mode = #tpu.pipeline_mode<synchronous>, transform_indices = @transform_5, window_bounds = array<i64: 1, 64>}, {pipeline_mode = #tpu.pipeline_mode<synchronous>, transform_indices = @transform_6, window_bounds = array<i64: 64, 32>}, {pipeline_mode = #tpu.pipeline_mode<synchronous>, transform_indices = @transform_7, window_bounds = array<i64: 1, 32>}, {pipeline_mode = #tpu.pipeline_mode<synchronous>, transform_indices = @transform_8, window_bounds = array<i64: 2, 32>}, {transform_indices = @transform_9, window_bounds = array<i64: 16, 32>}]} {
    %c0 = arith.constant 0 : index
    %c0_0 = arith.constant 0 : index
    %0 = vector.load %arg1[%c0, %c0_0] : memref<16x32xf32, #tpu.memory_space<vmem>>, vector<16x32xf32>
    %c0_1 = arith.constant 0 : index
    %c0_2 = arith.constant 0 : index
    %1 = vector.load %arg2[%c0_1, %c0_2] : memref<16x32xf32, #tpu.memory_space<vmem>>, vector<16x32xf32>
    %c0_3 = arith.constant 0 : index
    %c0_4 = arith.constant 0 : index
    %2 = vector.load %arg3[%c0_3, %c0_4] : memref<32x32xf32, #tpu.memory_space<vmem>>, vector<32x32xf32>
    %cst = arith.constant dense<0.000000e+00> : vector<16x32xf32>
    %3 = tpu.matmul %1, %2, %cst {dimension_numbers = #tpu.dot_dimension_numbers<[1], [0], [0], [1], [0, 0, 1, 1], [], []>} : vector<16x32xf32>, vector<32x32xf32>, vector<16x32xf32> -> vector<16x32xf32>
    %4 = arith.addf %0, %3 : vector<16x32xf32>
    %c0_5 = arith.constant 0 : index
    %c0_6 = arith.constant 0 : index
    %5 = vector.load %arg4[%c0_5, %c0_6] : memref<1x32xf32, #tpu.memory_space<vmem>>, vector<1x32xf32>
    %6 = vector.shape_cast %5 : vector<1x32xf32> to vector<32xf32>
    %7 = vector.shape_cast %6 : vector<32xf32> to vector<1x32xf32>
    %8 = vector.broadcast %7 : vector<1x32xf32> to vector<16x32xf32>
    %9 = arith.addf %4, %8 : vector<16x32xf32>
    %c0_7 = arith.constant 0 : index
    %c0_8 = arith.constant 0 : index
    %10 = vector.load %arg9[%c0_7, %c0_8] : memref<2x32xf32, #tpu.memory_space<vmem>>, vector<1x32xf32>
    %11 = vector.shape_cast %10 : vector<1x32xf32> to vector<32xf32>
    %c1 = arith.constant 1 : index
    %c0_9 = arith.constant 0 : index
    %12 = vector.load %arg9[%c1, %c0_9] : memref<2x32xf32, #tpu.memory_space<vmem>>, vector<1x32xf32>
    %13 = vector.shape_cast %12 : vector<1x32xf32> to vector<32xf32>
    %cst_10 = arith.constant dense<0.000000e+00> : vector<16xf32>
    %14 = vector.multi_reduction <add>, %9, %cst_10 [1] : vector<16x32xf32> to vector<16xf32>
    %15 = vector.shape_cast %14 : vector<16xf32> to vector<16x1xf32>
    %cst_11 = arith.constant 3.200000e+01 : f32
    %16 = vector.broadcast %cst_11 : f32 to vector<16x1xf32>
    %17 = arith.divf %15, %16 : vector<16x1xf32>
    %18 = vector.broadcast %17 : vector<16x1xf32> to vector<16x32xf32>
    %19 = arith.subf %9, %18 : vector<16x32xf32>
    %20 = arith.mulf %19, %19 : vector<16x32xf32>
    %cst_12 = arith.constant dense<0.000000e+00> : vector<16xf32>
    %21 = vector.multi_reduction <add>, %20, %cst_12 [1] : vector<16x32xf32> to vector<16xf32>
    %22 = vector.shape_cast %21 : vector<16xf32> to vector<16x1xf32>
    %cst_13 = arith.constant 3.200000e+01 : f32
    %23 = vector.broadcast %cst_13 : f32 to vector<16x1xf32>
    %24 = arith.divf %22, %23 : vector<16x1xf32>
    %25 = vector.broadcast %17 : vector<16x1xf32> to vector<16x32xf32>
    %26 = arith.subf %9, %25 : vector<16x32xf32>
    %cst_14 = arith.constant 9.99999974E-6 : f32
    %27 = vector.broadcast %cst_14 : f32 to vector<16x1xf32>
    %28 = arith.addf %24, %27 : vector<16x1xf32>
    %29 = math.rsqrt %28 : vector<16x1xf32>
    %30 = vector.broadcast %29 : vector<16x1xf32> to vector<16x32xf32>
    %31 = arith.mulf %26, %30 : vector<16x32xf32>
    %32 = vector.shape_cast %11 : vector<32xf32> to vector<1x32xf32>
    %33 = vector.broadcast %32 : vector<1x32xf32> to vector<16x32xf32>
    %34 = arith.mulf %31, %33 : vector<16x32xf32>
    %35 = vector.shape_cast %13 : vector<32xf32> to vector<1x32xf32>
    %36 = vector.broadcast %35 : vector<1x32xf32> to vector<16x32xf32>
    %37 = arith.addf %34, %36 : vector<16x32xf32>
    %c0_15 = arith.constant 0 : index
    %c0_16 = arith.constant 0 : index
    %38 = vector.load %arg5[%c0_15, %c0_16] : memref<32x64xf32, #tpu.memory_space<vmem>>, vector<32x64xf32>
    %cst_17 = arith.constant dense<0.000000e+00> : vector<16x64xf32>
    %39 = tpu.matmul %37, %38, %cst_17 {dimension_numbers = #tpu.dot_dimension_numbers<[1], [0], [0], [1], [0, 0, 1, 1], [], []>} : vector<16x32xf32>, vector<32x64xf32>, vector<16x64xf32> -> vector<16x64xf32>
    %c0_18 = arith.constant 0 : index
    %c0_19 = arith.constant 0 : index
    %40 = vector.load %arg6[%c0_18, %c0_19] : memref<1x64xf32, #tpu.memory_space<vmem>>, vector<1x64xf32>
    %41 = vector.shape_cast %40 : vector<1x64xf32> to vector<64xf32>
    %42 = vector.shape_cast %41 : vector<64xf32> to vector<1x64xf32>
    %43 = vector.broadcast %42 : vector<1x64xf32> to vector<16x64xf32>
    %44 = arith.addf %39, %43 : vector<16x64xf32>
    %cst_20 = arith.constant 0.000000e+00 : f32
    %45 = vector.broadcast %cst_20 : f32 to vector<16x64xf32>
    %46 = arith.maximumf %44, %45 : vector<16x64xf32>
    %c0_21 = arith.constant 0 : index
    %c0_22 = arith.constant 0 : index
    %47 = vector.load %arg7[%c0_21, %c0_22] : memref<64x32xf32, #tpu.memory_space<vmem>>, vector<64x32xf32>
    %cst_23 = arith.constant dense<0.000000e+00> : vector<16x32xf32>
    %48 = tpu.matmul %46, %47, %cst_23 {dimension_numbers = #tpu.dot_dimension_numbers<[1], [0], [0], [1], [0, 0, 1, 1], [], []>} : vector<16x64xf32>, vector<64x32xf32>, vector<16x32xf32> -> vector<16x32xf32>
    %c0_24 = arith.constant 0 : index
    %c0_25 = arith.constant 0 : index
    %49 = vector.load %arg8[%c0_24, %c0_25] : memref<1x32xf32, #tpu.memory_space<vmem>>, vector<1x32xf32>
    %50 = vector.shape_cast %49 : vector<1x32xf32> to vector<32xf32>
    %51 = vector.shape_cast %50 : vector<32xf32> to vector<1x32xf32>
    %52 = vector.broadcast %51 : vector<1x32xf32> to vector<16x32xf32>
    %53 = arith.addf %48, %52 : vector<16x32xf32>
    %54 = arith.addf %9, %53 : vector<16x32xf32>
    %c0_26 = arith.constant 0 : index
    %c0_27 = arith.constant 0 : index
    %55 = vector.load %arg10[%c0_26, %c0_27] : memref<16x32xf32, #tpu.memory_space<vmem>>, vector<16x32xf32>
    tpu.vector_store %arg10[%c0_26, %c0_27], %54 {strides = array<i32>} : memref<16x32xf32, #tpu.memory_space<vmem>>, vector<16x32xf32>,
    return
  }
  func.func @transform_0(%arg0: i32) -> (i32, i32) {
    %c0_i32 = arith.constant 0 : i32
    %c0_i32_0 = arith.constant 0 : i32
    return %arg0, %c0_i32 : i32, i32
  }
  func.func @transform_1(%arg0: i32) -> (i32, i32) {
    %c0_i32 = arith.constant 0 : i32
    %c0_i32_0 = arith.constant 0 : i32
    return %arg0, %c0_i32 : i32, i32
  }
  func.func @transform_2(%arg0: i32) -> (i32, i32) {
    %c0_i32 = arith.constant 0 : i32
    %c0_i32_0 = arith.constant 0 : i32
    %c0_i32_1 = arith.constant 0 : i32
    return %c0_i32, %c0_i32_0 : i32, i32
  }
  func.func @transform_3(%arg0: i32) -> (i32, i32) {
    %c0_i32 = arith.constant 0 : i32
    %c0_i32_0 = arith.constant 0 : i32
    %c0_i32_1 = arith.constant 0 : i32
    return %c0_i32, %c0_i32_0 : i32, i32
  }
  func.func @transform_4(%arg0: i32) -> (i32, i32) {
    %c0_i32 = arith.constant 0 : i32
    %c0_i32_0 = arith.constant 0 : i32
    %c0_i32_1 = arith.constant 0 : i32
    return %c0_i32, %c0_i32_0 : i32, i32
  }
  func.func @transform_5(%arg0: i32) -> (i32, i32) {
    %c0_i32 = arith.constant 0 : i32
    %c0_i32_0 = arith.constant 0 : i32
    %c0_i32_1 = arith.constant 0 : i32
    return %c0_i32, %c0_i32_0 : i32, i32
  }
  func.func @transform_6(%arg0: i32) -> (i32, i32) {
    %c0_i32 = arith.constant 0 : i32
    %c0_i32_0 = arith.constant 0 : i32
    %c0_i32_1 = arith.constant 0 : i32
    return %c0_i32, %c0_i32_0 : i32, i32
  }
  func.func @transform_7(%arg0: i32) -> (i32, i32) {
    %c0_i32 = arith.constant 0 : i32
    %c0_i32_0 = arith.constant 0 : i32
    %c0_i32_1 = arith.constant 0 : i32
    return %c0_i32, %c0_i32_0 : i32, i32
  }
  func.func @transform_8(%arg0: i32) -> (i32, i32) {
    %c0_i32 = arith.constant 0 : i32
    %c0_i32_0 = arith.constant 0 : i32
    %c0_i32_1 = arith.constant 0 : i32
    return %c0_i32, %c0_i32_0 : i32, i32
  }
  func.func @transform_9(%arg0: i32) -> (i32, i32) {
    %c0_i32 = arith.constant 0 : i32
    %c0_i32_0 = arith.constant 0 : i32
    return %arg0, %c0_i32 : i32, i32
  }
}

</mosaic_0001>

<llo_original>
// kernel: encoder_pallas.7
$region0: #{encoder_pallas.7}
  #allocation0 [shape = 'u32[]', space=smem, size = 0x4, offset = 0x4, fixed_abs, tag = 'smem constant byte address 0x4 - core index']
  #allocation1 [shape = 'u32[72,128]{1,0:T(1,128)}', space=vmem, size = 0x9000, scoped, tag = 'internal scratch']
  %s0 = inlined_call_operand.vmem [shape: f32[2,4,8,8], index: 0, kind: input, shape index: {}]
  %s1 = inlined_call_operand.vmem [shape: f32[2,4,8,8], index: 1, kind: input, shape index: {}]
  %s2 = inlined_call_operand.vmem [shape: f32[2,4,8,8], index: 2, kind: input, shape index: {}]
  %s3 = inlined_call_operand.vmem [shape: f32[2,4,8,8], index: 3, kind: output, shape index: {}]
  %s4 = sld [smem:[#allocation0]]
  $region45: #{encoder_pallas.7} parent=0
    _
  %s6 = ssub.s32 1, %s4
  %s7 = scalar_select 0, %s6, %s4
  loop: start=0, step=1, limit=4
  $region2: #{encoder_pallas.7} parent=0 // loop_pre_header
    _
  $region3: #{encoder_pallas.7} parent=0 // loop_header
    %s9 = sphi 0, %s13
    %p10 = scmp.ge.s32.totalorder %s9, 4
    %s16 = sphi 0, %s28
    %s17 = sphi 0, %s24
    %s18 = sphi 0, %s16
    %s19 = sphi 0, %s17
    %s20 = sphi 0, %s18
    %s21 = sphi 0, %s19
    %s33 = sphi 0, %s35
    %s36 = sphi 0, %s33
    %s37 = sphi 0, %s36
    %s53 = sphi 0, %s37
    %s59 = sphi 0, %s61
    %s62 = sphi 0, %s59
    %s63 = sphi 0, %s62
    %s79 = sphi 0, %s63
    %s85 = sphi 0, %s87
    %s88 = sphi 0, %s85
    %s89 = sphi 0, %s88
    %s105 = sphi 0, %s89
    %s113 = sphi 0, %s115
    %s116 = sphi 0, %s113
    %s117 = sphi 0, %s116
    %s133 = sphi 0, %s117
  $region4: #{encoder_pallas.7} parent=0 // loop_header_branch
    %12 = sbr.rel (%p10) target = $region8
  $region5: #{encoder_pallas.7} parent=0 // loop_body
    %s14 = ssub.s32 %s9, 1
    %s15 = ssub.s32 %s9, 2
    %s22 = sadd.s32 1, %s17
    %p23 = scmp.ge.s32.totalorder %s22, 1
    %s24 = scalar_select %p23, 0, %s22
    %s25 = sadd.s32 1, %s16
    %s26 = scalar_select %p23, %s25, %s16
    %p27 = scmp.ge.s32.totalorder %s26, 2
    %s28 = scalar_select %p27, 0, %s26
    %s29 = ssub.s32 %s16, %s28
    %s30 = ssub.s32 %s17, %s24
    %s31 = sor.u32 %s29, %s30
    %p32 = scmp.eq.s32.totalorder %s31, 0
    %s34 = sadd.s32 %s33, 1
    %s35 = scalar_select %p32, %s33, %s34
    %p38 = pneg %p32
    %p39 = scmp.eq.s32.totalorder %s9, 1
    %p40 = por %p38, %p39
    %p41 = scmp.ne.s32.totalorder %s33, %s36
    %p42 = scmp.eq.s32.totalorder %s9, 0
    %p43 = por %p41, %p42
    %p44 = scmp.ne.s32.totalorder %s33, %s36
    %p45 = scmp.eq.s32.totalorder %s14, 1
    %p46 = por %p44, %p45
    %p47 = scmp.ne.s32.totalorder %s36, %s37
    %p48 = scmp.eq.s32.totalorder %s14, 0
    %p49 = por %p47, %p48
    %p50 = scmp.ne.s32.totalorder %s36, %s37
    %p51 = scmp.eq.s32.totalorder %s15, 1
    %p52 = por %p50, %p51
    %p54 = scmp.ne.s32.totalorder %s37, %s53
    %p55 = scmp.eq.s32.totalorder %s15, 0
    %p56 = por %p54, %p55
    %s57 = ssub.s32 %s16, %s28
    %p58 = scmp.eq.s32.totalorder %s57, 0
    %s60 = sadd.s32 %s59, 1
    %s61 = scalar_select %p58, %s59, %s60
    %p64 = pneg %p58
    %p65 = scmp.eq.s32.totalorder %s9, 1
    %p66 = por %p64, %p65
    %p67 = scmp.ne.s32.totalorder %s59, %s62
    %p68 = scmp.eq.s32.totalorder %s9, 0
    %p69 = por %p67, %p68
    %p70 = scmp.ne.s32.totalorder %s59, %s62
    %p71 = scmp.eq.s32.totalorder %s14, 1
    %p72 = por %p70, %p71
    %p73 = scmp.ne.s32.totalorder %s62, %s63
    %p74 = scmp.eq.s32.totalorder %s14, 0
    %p75 = por %p73, %p74
    %p76 = scmp.ne.s32.totalorder %s62, %s63
    %p77 = scmp.eq.s32.totalorder %s15, 1
    %p78 = por %p76, %p77
    %p80 = scmp.ne.s32.totalorder %s63, %s79
    %p81 = scmp.eq.s32.totalorder %s15, 0
    %p82 = por %p80, %p81
    %s83 = ssub.s32 %s16, %s28
    %p84 = scmp.eq.s32.totalorder %s83, 0
    %s86 = sadd.s32 %s85, 1
    %s87 = scalar_select %p84, %s85, %s86
    %p90 = pneg %p84
    %p91 = scmp.eq.s32.totalorder %s9, 1
    %p92 = por %p90, %p91
    %p93 = scmp.ne.s32.totalorder %s85, %s88
    %p94 = scmp.eq.s32.totalorder %s9, 0
    %p95 = por %p93, %p94
    %p96 = scmp.ne.s32.totalorder %s85, %s88
    %p97 = scmp.eq.s32.totalorder %s14, 1
    %p98 = por %p96, %p97
    %p99 = scmp.ne.s32.totalorder %s88, %s89
    %p100 = scmp.eq.s32.totalorder %s14, 0
    %p101 = por %p99, %p100
    %p102 = scmp.ne.s32.totalorder %s88, %s89
    %p103 = scmp.eq.s32.totalorder %s15, 1
    %p104 = por %p102, %p103
    %p106 = scmp.ne.s32.totalorder %s89, %s105
    %p107 = scmp.eq.s32.totalorder %s15, 0
    %p108 = por %p106, %p107
    %s109 = ssub.s32 %s16, %s28
    %s110 = ssub.s32 %s17, %s24
    %s111 = sor.u32 %s109, %s110
    %p112 = scmp.eq.s32.totalorder %s111, 0
    %s114 = sadd.s32 %s113, 1
    %s115 = scalar_select %p112, %s113, %s114
    %p118 = pneg %p112
    %p119 = scmp.eq.s32.totalorder %s9, 1
    %p120 = por %p118, %p119
    %p121 = scmp.ne.s32.totalorder %s113, %s116
    %p122 = scmp.eq.s32.totalorder %s9, 0
    %p123 = por %p121, %p122
    %p124 = scmp.ne.s32.totalorder %s113, %s116
    %p125 = scmp.eq.s32.totalorder %s14, 1
    %p126 = por %p124, %p125
    %p127 = scmp.ne.s32.totalorder %s116, %s117
    %p128 = scmp.eq.s32.totalorder %s14, 0
    %p129 = por %p127, %p128
    %p130 = scmp.ne.s32.totalorder %s116, %s117
    %p131 = scmp.eq.s32.totalorder %s15, 1
    %p132 = por %p130, %p131
    %p134 = scmp.ne.s32.totalorder %s117, %s133
    %p135 = scmp.eq.s32.totalorder %s15, 0
    %p136 = por %p134, %p135
    %p137 = scmp.le.s32.totalorder 1, %s9
    %p138 = scmp.lt.s32.totalorder %s9, 3
    %p139 = pnand %p137, %p138
    %p140 = pneg %p139
    // Predicated region
    $region9: #{encoder_pallas.7} parent=5 // pred_check
      _
    $region10: #{encoder_pallas.7} parent=5 // pred_check_branch
      %142 = sbr.rel (%p139) target = $region12
    $region11: #{encoder_pallas.7} parent=5 // pred_region
      %s143 = ssub.s32 %s9, 1
    $region12: #{encoder_pallas.7} parent=5 // pred_fallthru
      _
    %p144 = scmp.lt.s32.totalorder %s9, 2
    // Predicated region
    $region13: #{encoder_pallas.7} parent=5 // pred_check
      %p145 = pneg %p144
    $region14: #{encoder_pallas.7} parent=5 // pred_check_branch
      %147 = sbr.rel (%p145) target = $region16
    $region15: #{encoder_pallas.7} parent=5 // pred_region
      // Predicated region
      $region17: #{encoder_pallas.7} parent=15 // pred_check
        %p148 = pneg %p43
      $region18: #{encoder_pallas.7} parent=15 // pred_check_branch
        %150 = sbr.rel (%p148) target = $region20
      $region19: #{encoder_pallas.7} parent=15 // pred_region
        %p151 = scmp.lt.s32.totalorder %s16, 1
        %s152 = scalar_select %p151, %s16, 1
        %p153 = scmp.lt.s32.totalorder %s17, 0
        %s154 = scalar_select %p153, %s17, 0
        %s155 = smul.addr %s152, 4
        %s156 = sadd.s32 %s154, %s155
        %s157 = smul.addr %s156, 8
        %s158 = scalar_lea.vmem %s0, %s157
      $region20: #{encoder_pallas.7} parent=15 // pred_fallthru
        _
      // Predicated region
      $region21: #{encoder_pallas.7} parent=15 // pred_check
        %p159 = pneg %p69
      $region22: #{encoder_pallas.7} parent=15 // pred_check_branch
        %161 = sbr.rel (%p159) target = $region24
      $region23: #{encoder_pallas.7} parent=15 // pred_region
        %p162 = scmp.lt.s32.totalorder %s16, 1
        %s163 = scalar_select %p162, %s16, 1
        %s164 = smul.addr %s163, 4
        %s165 = smul.addr %s164, 8
        %s166 = scalar_lea.vmem %s1, %s165
      $region24: #{encoder_pallas.7} parent=15 // pred_fallthru
        _
      // Predicated region
      $region25: #{encoder_pallas.7} parent=15 // pred_check
        %p167 = pneg %p95
      $region26: #{encoder_pallas.7} parent=15 // pred_check_branch
        %169 = sbr.rel (%p167) target = $region28
      $region27: #{encoder_pallas.7} parent=15 // pred_region
        %p170 = scmp.lt.s32.totalorder %s16, 1
        %s171 = scalar_select %p170, %s16, 1
        %s172 = smul.addr %s171, 4
        %s173 = smul.addr %s172, 8
        %s174 = scalar_lea.vmem %s2, %s173
      $region28: #{encoder_pallas.7} parent=15 // pred_fallthru
        _
    $region16: #{encoder_pallas.7} parent=5 // pred_fallthru
      _
    %p175 = scmp.le.s32.totalorder 1, %s9
    %p176 = scmp.lt.s32.totalorder %s9, 3
    %p177 = pnand %p175, %p176
    %p178 = pneg %p177
    // Predicated region
    $region29: #{encoder_pallas.7} parent=5 // pred_check
      _
    $region30: #{encoder_pallas.7} parent=5 // pred_check_branch
      %180 = sbr.rel (%p177) target = $region32
    $region31: #{encoder_pallas.7} parent=5 // pred_region
      %s181 = ssub.s32 %s9, 1
      %p182 = scmp.lt.s32.totalorder %s18, 1
      %s183 = scalar_select %p182, %s18, 1
      %p184 = scmp.lt.s32.totalorder %s19, 0
      %s185 = scalar_select %p184, %s19, 0
      %s186 = smul.addr %s183, 4
      %s187 = sadd.s32 %s185, %s186
      %s188 = smul.addr %s187, 8
      %s189 = scalar_lea.vmem %s0, %s188
      %p190 = pneg %p49
      %p191 = pneg %p46
      %p192 = scmp.lt.s32.totalorder %s18, 1
      %s193 = scalar_select %p192, %s18, 1
      %s194 = smul.addr %s193, 4
      %s195 = smul.addr %s194, 8
      %s196 = scalar_lea.vmem %s1, %s195
      %p197 = pneg %p75
      %p198 = pneg %p72
      %p199 = scmp.lt.s32.totalorder %s18, 1
      %s200 = scalar_select %p199, %s18, 1
      %s201 = smul.addr %s200, 4
      %s202 = smul.addr %s201, 8
      %s203 = scalar_lea.vmem %s2, %s202
      %p204 = pneg %p101
      %p205 = pneg %p98
      %p206 = pneg %p129
      %p207 = pneg %p126
      %p208 = scmp.lt.s32.totalorder %s18, 1
      %s209 = scalar_select %p208, %s18, 1
      %p210 = scmp.lt.s32.totalorder %s19, 0
      %s211 = scalar_select %p210, %s19, 0
      %s212 = smul.addr %s209, 4
      %s213 = sadd.s32 %s211, %s212
      %s214 = smul.addr %s213, 8
      %s215 = scalar_lea.vmem %s3, %s214
      %p216 = scmp.lt.s32.totalorder %s18, 1
      %s217 = scalar_select %p216, %s18, 1
      %p218 = scmp.lt.s32.totalorder %s19, 0
      %s219 = scalar_select %p218, %s19, 0
      %s220 = smul.addr %s217, 4
      %s221 = sadd.s32 %s219, %s220
      %s222 = smul.addr %s221, 8
      %s223 = scalar_lea.vmem %s0, %s222
      %p224 = scmp.lt.s32.totalorder %s18, 1
      %s225 = scalar_select %p224, %s18, 1
      %s226 = smul.addr %s225, 4
      %s227 = smul.addr %s226, 8
      %s228 = scalar_lea.vmem %s1, %s227
      %p229 = scmp.lt.s32.totalorder %s18, 1
      %s230 = scalar_select %p229, %s18, 1
      %s231 = smul.addr %s230, 4
      %s232 = smul.addr %s231, 8
      %s233 = scalar_lea.vmem %s2, %s232
      %p234 = scmp.lt.s32.totalorder %s18, 1
      %s235 = scalar_select %p234, %s18, 1
      %p236 = scmp.lt.s32.totalorder %s19, 0
      %s237 = scalar_select %p236, %s19, 0
      %s238 = smul.addr %s235, 4
      %s239 = sadd.s32 %s237, %s238
      %s240 = smul.addr %s239, 8
      %s241 = scalar_lea.vmem %s3, %s240
      %v242 = vld [vmem:[%s223] sm:$0xff]
      %v243 = vld [vmem:[%s223 + $0x8] sm:$0xff]
      %v244 = vld [vmem:[%s223 + $0x10] sm:$0xff]
      %v245 = vld [vmem:[%s223 + $0x18] sm:$0xff]
      %v246 = vld [vmem:[%s228] sm:$0xff]
      %v247 = vld [vmem:[%s228 + $0x8] sm:$0xff]
      %v248 = vld [vmem:[%s228 + $0x10] sm:$0xff]
      %v249 = vld [vmem:[%s228 + $0x18] sm:$0xff]
      %v250 = vld [vmem:[%s233] sm:$0xff]
      %v251 = vld [vmem:[%s233 + $0x8] sm:$0xff]
      %v252 = vld [vmem:[%s233 + $0x10] sm:$0xff]
      %v253 = vld [vmem:[%s233 + $0x18] sm:$0xff]
      %vm254 = vcmask 64512
      %v256 = vsel %vm254, %v242, 0
      %v259 = vsel %vm254, %v246, 0
      %261 = vmatpush.xpose.msra.mxu0 0.0
      %262 = vmatpush.xpose.msra.mxu0 0.0
      %263 = vmatpush.xpose.msra.mxu0 0.0
      %264 = vmatpush.xpose.msra.mxu0 0.0
      %265 = vmatpush.xpose.msra.mxu0 0.0
      %266 = vmatpush.xpose.msra.mxu0 0.0
      %267 = vmatpush.xpose.msra.mxu0 0.0
      %268 = vmatpush.xpose.msra.mxu0 0.0
      %269 = vmatpush.xpose.msra.mxu0 0.0
      %270 = vmatpush.xpose.msra.mxu0 0.0
      %271 = vmatpush.xpose.msra.mxu0 0.0
      %272 = vmatpush.xpose.msra.mxu0 0.0
      %273 = vmatpush.xpose.msra.mxu0 0.0
      %274 = vmatpush.xpose.msra.mxu0 0.0
      %275 = vmatpush.xpose.msra.mxu0 0.0
      %276 = vmatpush.xpose.msra.mxu0 %v259
      %277 = vmatmul.f32.gmra.mxu0 %v256
      %v278 = vpop.f32.mrf.mxu0
      %v279 = vadd.f32 0.0, %v278
      %280 = vdwg.mxu0
      %v282 = vsel %vm254, %v243, 0
      %v285 = vsel %vm254, %v247, 0
      %287 = vmatpush.xpose.msra.mxu0 0.0
      %288 = vmatpush.xpose.msra.mxu0 0.0
      %289 = vmatpush.xpose.msra.mxu0 0.0
      %290 = vmatpush.xpose.msra.mxu0 0.0
      %291 = vmatpush.xpose.msra.mxu0 0.0
      %292 = vmatpush.xpose.msra.mxu0 0.0
      %293 = vmatpush.xpose.msra.mxu0 0.0
      %294 = vmatpush.xpose.msra.mxu0 0.0
      %295 = vmatpush.xpose.msra.mxu0 0.0
      %296 = vmatpush.xpose.msra.mxu0 0.0
      %297 = vmatpush.xpose.msra.mxu0 0.0
      %298 = vmatpush.xpose.msra.mxu0 0.0
      %299 = vmatpush.xpose.msra.mxu0 0.0
      %300 = vmatpush.xpose.msra.mxu0 0.0
      %301 = vmatpush.xpose.msra.mxu0 0.0
      %302 = vmatpush.xpose.msra.mxu0 %v285
      %303 = vmatmul.f32.gmra.mxu0 %v282
      %v304 = vpop.f32.mrf.mxu0
      %v305 = vadd.f32 0.0, %v304
      %306 = vdwg.mxu0
      %v308 = vsel %vm254, %v244, 0
      %v311 = vsel %vm254, %v248, 0
      %313 = vmatpush.xpose.msra.mxu0 0.0
      %314 = vmatpush.xpose.msra.mxu0 0.0
      %315 = vmatpush.xpose.msra.mxu0 0.0
      %316 = vmatpush.xpose.msra.mxu0 0.0
      %317 = vmatpush.xpose.msra.mxu0 0.0
      %318 = vmatpush.xpose.msra.mxu0 0.0
      %319 = vmatpush.xpose.msra.mxu0 0.0
      %320 = vmatpush.xpose.msra.mxu0 0.0
      %321 = vmatpush.xpose.msra.mxu0 0.0
      %322 = vmatpush.xpose.msra.mxu0 0.0
      %323 = vmatpush.xpose.msra.mxu0 0.0
      %324 = vmatpush.xpose.msra.mxu0 0.0
      %325 = vmatpush.xpose.msra.mxu0 0.0
      %326 = vmatpush.xpose.msra.mxu0 0.0
      %327 = vmatpush.xpose.msra.mxu0 0.0
      %328 = vmatpush.xpose.msra.mxu0 %v311
      %329 = vmatmul.f32.gmra.mxu0 %v308
      %v330 = vpop.f32.mrf.mxu0
      %v331 = vadd.f32 0.0, %v330
      %332 = vdwg.mxu0
      %v334 = vsel %vm254, %v245, 0
      %v337 = vsel %vm254, %v249, 0
      %339 = vmatpush.xpose.msra.mxu0 0.0
      %340 = vmatpush.xpose.msra.mxu0 0.0
      %341 = vmatpush.xpose.msra.mxu0 0.0
      %342 = vmatpush.xpose.msra.mxu0 0.0
      %343 = vmatpush.xpose.msra.mxu0 0.0
      %344 = vmatpush.xpose.msra.mxu0 0.0
      %345 = vmatpush.xpose.msra.mxu0 0.0
      %346 = vmatpush.xpose.msra.mxu0 0.0
      %347 = vmatpush.xpose.msra.mxu0 0.0
      %348 = vmatpush.xpose.msra.mxu0 0.0
      %349 = vmatpush.xpose.msra.mxu0 0.0
      %350 = vmatpush.xpose.msra.mxu0 0.0
      %351 = vmatpush.xpose.msra.mxu0 0.0
      %352 = vmatpush.xpose.msra.mxu0 0.0
      %353 = vmatpush.xpose.msra.mxu0 0.0
      %354 = vmatpush.xpose.msra.mxu0 %v337
      %355 = vmatmul.f32.gmra.mxu0 %v334
      %v356 = vpop.f32.mrf.mxu0
      %v357 = vadd.f32 0.0, %v356
      %358 = vdwg.mxu0
      %v359 = vsel %vm254, %v279, -inf
      %360 = vmax.xlane.f32.xlu0 %v359
      %v361 = vpop.xlane.xlu0 %360
      %v362 = vsel %vm254, %v305, -inf
      %363 = vmax.xlane.f32.xlu0 %v362
      %v364 = vpop.xlane.xlu0 %363
      %v365 = vsel %vm254, %v331, -inf
      %366 = vmax.xlane.f32.xlu0 %v365
      %v367 = vpop.xlane.xlu0 %366
      %v368 = vsel %vm254, %v357, -inf
      %369 = vmax.xlane.f32.xlu0 %v368
      %v370 = vpop.xlane.xlu0 %369
      %v371 = vsub.f32 %v279, %v361
      %v372 = vsub.f32 %v305, %v364
      %v373 = vsub.f32 %v331, %v367
      %v374 = vsub.f32 %v357, %v370
      %v375 = vmul.f32 %v371, 1.442695
      %v376 = vpow.pop %v375
      %v377 = vmul.f32 %v372, 1.442695
      %v378 = vpow.pop %v377
      %v379 = vmul.f32 %v373, 1.442695
      %v380 = vpow.pop %v379
      %v381 = vmul.f32 %v374, 1.442695
      %v382 = vpow.pop %v381
      %v383 = vsel %vm254, %v376, 0.0
      %384 = vadd.xlane.f32.xlu0 %v383
      %v385 = vpop.xlane.xlu0 %384
      %v386 = vsel %vm254, %v378, 0.0
      %387 = vadd.xlane.f32.xlu0 %v386
      %v388 = vpop.xlane.xlu0 %387
      %v389 = vsel %vm254, %v380, 0.0
      %390 = vadd.xlane.f32.xlu0 %v389
      %v391 = vpop.xlane.xlu0 %390
      %v392 = vsel %vm254, %v382, 0.0
      %393 = vadd.xlane.f32.xlu0 %v392
      %v394 = vpop.xlane.xlu0 %393
      %v396 = vsel %vm254, %v376, 0
      %398 = vmatpush.msra.mxu0 0.0
      %399 = vmatpush.msra.mxu0 0.0
      %400 = vmatpush.msra.mxu0 0.0
      %401 = vmatpush.msra.mxu0 0.0
      %402 = vmatpush.msra.mxu0 0.0
      %403 = vmatpush.msra.mxu0 0.0
      %404 = vmatpush.msra.mxu0 0.0
      %405 = vmatpush.msra.mxu0 0.0
      %406 = vmatpush.msra.mxu0 0.0
      %407 = vmatpush.msra.mxu0 0.0
      %408 = vmatpush.msra.mxu0 0.0
      %409 = vmatpush.msra.mxu0 0.0
      %410 = vmatpush.msra.mxu0 0.0
      %411 = vmatpush.msra.mxu0 0.0
      %412 = vmatpush.msra.mxu0 0.0
      %413 = vmatpush.msra.mxu0 %v250
      %414 = vmatmul.f32.gmra.mxu0 %v396
      %v415 = vpop.f32.mrf.mxu0
      %v416 = vadd.f32 0.0, %v415
      %417 = vdwg.mxu0
      %v419 = vsel %vm254, %v378, 0
      %421 = vmatpush.msra.mxu0 0.0
      %422 = vmatpush.msra.mxu0 0.0
      %423 = vmatpush.msra.mxu0 0.0
      %424 = vmatpush.msra.mxu0 0.0
      %425 = vmatpush.msra.mxu0 0.0
      %426 = vmatpush.msra.mxu0 0.0
      %427 = vmatpush.msra.mxu0 0.0
      %428 = vmatpush.msra.mxu0 0.0
      %429 = vmatpush.msra.mxu0 0.0
      %430 = vmatpush.msra.mxu0 0.0
      %431 = vmatpush.msra.mxu0 0.0
      %432 = vmatpush.msra.mxu0 0.0
      %433 = vmatpush.msra.mxu0 0.0
      %434 = vmatpush.msra.mxu0 0.0
      %435 = vmatpush.msra.mxu0 0.0
      %436 = vmatpush.msra.mxu0 %v251
      %437 = vmatmul.f32.gmra.mxu0 %v419
      %v438 = vpop.f32.mrf.mxu0
      %v439 = vadd.f32 0.0, %v438
      %440 = vdwg.mxu0
      %v442 = vsel %vm254, %v380, 0
      %444 = vmatpush.msra.mxu0 0.0
      %445 = vmatpush.msra.mxu0 0.0
      %446 = vmatpush.msra.mxu0 0.0
      %447 = vmatpush.msra.mxu0 0.0
      %448 = vmatpush.msra.mxu0 0.0
      %449 = vmatpush.msra.mxu0 0.0
      %450 = vmatpush.msra.mxu0 0.0
      %451 = vmatpush.msra.mxu0 0.0
      %452 = vmatpush.msra.mxu0 0.0
      %453 = vmatpush.msra.mxu0 0.0
      %454 = vmatpush.msra.mxu0 0.0
      %455 = vmatpush.msra.mxu0 0.0
      %456 = vmatpush.msra.mxu0 0.0
      %457 = vmatpush.msra.mxu0 0.0
      %458 = vmatpush.msra.mxu0 0.0
      %459 = vmatpush.msra.mxu0 %v252
      %460 = vmatmul.f32.gmra.mxu0 %v442
      %v461 = vpop.f32.mrf.mxu0
      %v462 = vadd.f32 0.0, %v461
      %463 = vdwg.mxu0
      %v465 = vsel %vm254, %v382, 0
      %467 = vmatpush.msra.mxu0 0.0
      %468 = vmatpush.msra.mxu0 0.0
      %469 = vmatpush.msra.mxu0 0.0
      %470 = vmatpush.msra.mxu0 0.0
      %471 = vmatpush.msra.mxu0 0.0
      %472 = vmatpush.msra.mxu0 0.0
      %473 = vmatpush.msra.mxu0 0.0
      %474 = vmatpush.msra.mxu0 0.0
      %475 = vmatpush.msra.mxu0 0.0
      %476 = vmatpush.msra.mxu0 0.0
      %477 = vmatpush.msra.mxu0 0.0
      %478 = vmatpush.msra.mxu0 0.0
      %479 = vmatpush.msra.mxu0 0.0
      %480 = vmatpush.msra.mxu0 0.0
      %481 = vmatpush.msra.mxu0 0.0
      %482 = vmatpush.msra.mxu0 %v253
      %483 = vmatmul.f32.gmra.mxu0 %v465
      %v484 = vpop.f32.mrf.mxu0
      %v485 = vadd.f32 0.0, %v484
      %486 = vdwg.mxu0
      %v487 = vrcp.pop %v385
      %v488 = vrcp.pop %v388
      %v489 = vrcp.pop %v391
      %v490 = vrcp.pop %v394
      %v491 = vmul.f32 %v416, %v487
      %v492 = vmul.f32 %v439, %v488
      %v493 = vmul.f32 %v462, %v489
      %v494 = vmul.f32 %v485, %v490
      %495 = vst.msk [vmem:[%s241] sm:$0xff] %vm254, %v491
      %496 = vst.msk [vmem:[%s241 + $0x8] sm:$0xff] %vm254, %v492
      %497 = vst.msk [vmem:[%s241 + $0x10] sm:$0xff] %vm254, %v493
      %498 = vst.msk [vmem:[%s241 + $0x18] sm:$0xff] %vm254, %v494
      %p499 = scmp.lt.s32.totalorder %s18, 1
      %s500 = scalar_select %p499, %s18, 1
      %p501 = scmp.lt.s32.totalorder %s19, 0
      %s502 = scalar_select %p501, %s19, 0
      %s503 = smul.addr %s500, 4
      %s504 = sadd.s32 %s502, %s503
      %s505 = smul.addr %s504, 8
      %s506 = scalar_lea.vmem %s3, %s505
      // Predicated region
      $region33: #{encoder_pallas.7} parent=31 // pred_check
        %p507 = pneg %p126
      $region34: #{encoder_pallas.7} parent=31 // pred_check_branch
        %509 = sbr.rel (%p507) target = $region36
      $region35: #{encoder_pallas.7} parent=31 // pred_region
        _
      $region36: #{encoder_pallas.7} parent=31 // pred_fallthru
        _
    $region32: #{encoder_pallas.7} parent=5 // pred_fallthru
      _
    %p510 = scmp.le.s32.totalorder 2, %s9
    // Predicated region
    $region37: #{encoder_pallas.7} parent=5 // pred_check
      %p511 = pneg %p510
    $region38: #{encoder_pallas.7} parent=5 // pred_check_branch
      %513 = sbr.rel (%p511) target = $region40
    $region39: #{encoder_pallas.7} parent=5 // pred_region
      %s514 = ssub.s32 %s9, 2
      // Predicated region
      $region41: #{encoder_pallas.7} parent=39 // pred_check
        %p515 = pneg %p132
      $region42: #{encoder_pallas.7} parent=39 // pred_check_branch
        %517 = sbr.rel (%p515) target = $region44
      $region43: #{encoder_pallas.7} parent=39 // pred_region
        %p518 = scmp.lt.s32.totalorder %s20, 1
        %s519 = scalar_select %p518, %s20, 1
        %p520 = scmp.lt.s32.totalorder %s21, 0
        %s521 = scalar_select %p520, %s21, 0
        %s522 = smul.addr %s519, 4
        %s523 = sadd.s32 %s521, %s522
        %s524 = smul.addr %s523, 8
        %s525 = scalar_lea.vmem %s3, %s524
      $region44: #{encoder_pallas.7} parent=39 // pred_fallthru
        _
    $region40: #{encoder_pallas.7} parent=5 // pred_fallthru
      _
  $region6: #{encoder_pallas.7} parent=0 // loop_footer
    %s13 = sadd.s32 1, %s9
  $region7: #{encoder_pallas.7} parent=0 // loop_footer_branch
    %8 = sbr.rel target = $region3
  $region8: #{encoder_pallas.7} parent=0 // loop_exit
    _

// kernel: encoder_pallas.9
$region0: #{encoder_pallas.9}
  #allocation0 [shape = 'u32[]', space=smem, size = 0x4, offset = 0x4, fixed_abs, tag = 'smem constant byte address 0x4 - core index']
  #allocation1 [shape = 'u32[72,128]{1,0:T(1,128)}', space=vmem, size = 0x9000, scoped, tag = 'internal scratch']
  %s0 = inlined_call_operand.vmem [shape: f32[16,32], index: 0, kind: input, shape index: {}]
  %s1 = inlined_call_operand.vmem [shape: f32[32,96], index: 1, kind: input, shape index: {}]
  %s2 = inlined_call_operand.vmem [shape: f32[1,96], index: 2, kind: input, shape index: {}]
  %s3 = inlined_call_operand.vmem [shape: f32[2,32], index: 3, kind: input, shape index: {}]
  %s4 = inlined_call_operand.vmem [shape: f32[16,96], index: 4, kind: output, shape index: {}]
  %s5 = sld [smem:[#allocation0]]
  $region26: #{encoder_pallas.9} parent=0
    _
  %s7 = ssub.s32 1, %s5
  %s8 = scalar_select 0, %s7, %s5
  // Predicated region
  $region2: #{encoder_pallas.9} parent=0 // pred_check
    _
  $region3: #{encoder_pallas.9} parent=0 // pred_check_branch
    %10 = sbr.rel (0) target = $region5
  $region4: #{encoder_pallas.9} parent=0 // pred_region
    _
  $region5: #{encoder_pallas.9} parent=0 // pred_fallthru
    _
  // Predicated region
  $region6: #{encoder_pallas.9} parent=0 // pred_check
    _
  $region7: #{encoder_pallas.9} parent=0 // pred_check_branch
    %12 = sbr.rel (0) target = $region9
  $region8: #{encoder_pallas.9} parent=0 // pred_region
    _
  $region9: #{encoder_pallas.9} parent=0 // pred_fallthru
    _
  // Predicated region
  $region10: #{encoder_pallas.9} parent=0 // pred_check
    _
  $region11: #{encoder_pallas.9} parent=0 // pred_check_branch
    %14 = sbr.rel (0) target = $region13
  $region12: #{encoder_pallas.9} parent=0 // pred_region
    _
  $region13: #{encoder_pallas.9} parent=0 // pred_fallthru
    _
  // Predicated region
  $region14: #{encoder_pallas.9} parent=0 // pred_check
    _
  $region15: #{encoder_pallas.9} parent=0 // pred_check_branch
    %16 = sbr.rel (0) target = $region17
  $region16: #{encoder_pallas.9} parent=0 // pred_region
    _
  $region17: #{encoder_pallas.9} parent=0 // pred_fallthru
    _
  %v17 = vld [vmem:[%s0] sm:$0xff]
  %v18 = vld [vmem:[%s0 + $0x8] sm:$0xff]
  %v19 = vld [vmem:[%s3] sm:$0x1]
  %v20 = vld [vmem:[%s3 + $0x1] sm:$0x1]
  %vm21 = vcmask 261120
  %v22 = vsel %vm21, %v17, 0.0
  %23 = vadd.xlane.f32.xlu0 %v22
  %v24 = vpop.xlane.xlu0 %23
  %v25 = vsel %vm21, %v18, 0.0
  %26 = vadd.xlane.f32.xlu0 %v25
  %v27 = vpop.xlane.xlu0 %26
  %v28 = vrcp.pop 32.0
  %v29 = vmul.f32 32.0, %v28
  %v30 = vsub.f32 1.0, %v29
  %v31 = vmul.f32 %v28, %v30
  %v32 = vadd.f32 %v28, %v31
  %vm33 = vweird.f32 %v28
  %v34 = vsel %vm33, %v28, %v32
  %v35 = vmul.f32 %v24, %v34
  %v36 = vmul.f32 %v27, %v34
  %v37 = vsub.f32 %v17, %v35
  %v38 = vsub.f32 %v18, %v36
  %v39 = vmul.f32 %v37, %v37
  %v40 = vmul.f32 %v38, %v38
  %v41 = vsel %vm21, %v39, 0.0
  %42 = vadd.xlane.f32.xlu0 %v41
  %v43 = vpop.xlane.xlu0 %42
  %v44 = vsel %vm21, %v40, 0.0
  %45 = vadd.xlane.f32.xlu0 %v44
  %v46 = vpop.xlane.xlu0 %45
  %v47 = vmul.f32 %v43, %v34
  %v48 = vmul.f32 %v46, %v34
  %v49 = vadd.f32 %v47, 1e-05
  %v50 = vadd.f32 %v48, 1e-05
  %v51 = vrsqrt.pop %v49
  %v52 = vmul.f32 %v51, %v49
  %v53 = vmul.f32 %v52, %v51
  %v54 = vmul.f32 0.5, %v53
  %v55 = vsub.f32 1.5, %v54
  %v56 = vmul.f32 %v51, %v55
  %vm57 = vweird.f32 %v49
  %vm58 = vweird.f32 %v51
  %vm59 = vmor %vm57, %vm58
  %v60 = vsel %vm59, %v51, %v56
  %v61 = vrsqrt.pop %v50
  %v62 = vmul.f32 %v61, %v50
  %v63 = vmul.f32 %v62, %v61
  %v64 = vmul.f32 0.5, %v63
  %v65 = vsub.f32 1.5, %v64
  %v66 = vmul.f32 %v61, %v65
  %vm67 = vweird.f32 %v50
  %vm68 = vweird.f32 %v61
  %vm69 = vmor %vm67, %vm68
  %v70 = vsel %vm69, %v61, %v66
  %v71 = vmul.f32 %v37, %v60
  %v72 = vmul.f32 %v38, %v70
  %v73 = vperm.slane %v19, 0
  %v74 = vmul.f32 %v71, %v73
  %v75 = vmul.f32 %v72, %v73
  %v76 = vperm.slane %v20, 0
  %v77 = vadd.f32 %v74, %v76
  %v78 = vadd.f32 %v75, %v76
  %v79 = vld [vmem:[%s1] sm:$0xff]
  %v80 = vld [vmem:[%s1 + $0x8] sm:$0xff]
  %v81 = vld [vmem:[%s1 + $0x10] sm:$0xff]
  %v82 = vld [vmem:[%s1 + $0x18] sm:$0xff]
  %v83 = vld [vmem:[%s2] sm:$0x1]
  %v85 = vperm.slane %v83, 0
  %v88 = vsel %vm21, %v77, 0
  %v91 = vsel %vm21, %v78, 0
  %93 = vmatpush.msra.mxu0 0.0
  %94 = vmatpush.msra.mxu0 0.0
  %95 = vmatpush.msra.mxu0 0.0
  %96 = vmatpush.msra.mxu0 0.0
  %97 = vmatpush.msra.mxu0 0.0
  %98 = vmatpush.msra.mxu0 0.0
  %99 = vmatpush.msra.mxu0 0.0
  %100 = vmatpush.msra.mxu0 0.0
  %101 = vmatpush.msra.mxu0 0.0
  %102 = vmatpush.msra.mxu0 0.0
  %103 = vmatpush.msra.mxu0 0.0
  %104 = vmatpush.msra.mxu0 0.0
  %105 = vmatpush.msra.mxu0 %v82
  %106 = vmatpush.msra.mxu0 %v81
  %107 = vmatpush.msra.mxu0 %v80
  %108 = vmatpush.msra.mxu0 %v79
  %109 = vmatmul.f32.gmra.mxu0 %v88
  %v110 = vpop.f32.mrf.mxu0
  %v111 = vadd.f32 %v85, %v110
  %112 = vmatmul.f32.gmra.mxu0 %v91
  %v113 = vpop.f32.mrf.mxu0
  %v114 = vadd.f32 %v85, %v113
  %115 = vdwg.mxu0
  %vm116 = vcmask 785408
  %117 = vst.msk [vmem:[%s4] sm:$0xff] %vm116, %v111
  %118 = vst.msk [vmem:[%s4 + $0x8] sm:$0xff] %vm116, %v114
  // Predicated region
  $region18: #{encoder_pallas.9} parent=0 // pred_check
    _
  $region19: #{encoder_pallas.9} parent=0 // pred_check_branch
    %120 = sbr.rel (0) target = $region21
  $region20: #{encoder_pallas.9} parent=0 // pred_region
    _
  $region21: #{encoder_pallas.9} parent=0 // pred_fallthru
    _
  // Predicated region
  $region22: #{encoder_pallas.9} parent=0 // pred_check
    _
  $region23: #{encoder_pallas.9} parent=0 // pred_check_branch
    %122 = sbr.rel (0) target = $region25
  $region24: #{encoder_pallas.9} parent=0 // pred_region
    _
  $region25: #{encoder_pallas.9} parent=0 // pred_fallthru
    _

// kernel: encoder_pallas.6
$region0: #{encoder_pallas.6}
  #allocation0 [shape = 'u32[]', space=smem, size = 0x4, offset = 0x4, fixed_abs, tag = 'smem constant byte address 0x4 - core index']
  #allocation1 [shape = 'u32[72,128]{1,0:T(1,128)}', space=vmem, size = 0x9000, scoped, tag = 'internal scratch']
  %s0 = inlined_call_operand.hbm [shape: f32[16,32], index: 0, kind: input, shape index: {}]
  %s1 = inlined_call_operand.hbm [shape: f32[32,96], index: 1, kind: input, shape index: {}]
  %s2 = inlined_call_operand.vmem [shape: f32[1,96], index: 2, kind: input, shape index: {}]
  %s3 = inlined_call_operand.vmem [shape: f32[2,32], index: 3, kind: input, shape index: {}]
  %s4 = inlined_call_operand.vmem [shape: f32[16,96], index: 4, kind: output, shape index: {}]
  %s5 = sld [smem:[#allocation0]]
  $region34: #{encoder_pallas.6} parent=0
    _
  %s7 = ssub.s32 1, %s5
  %s8 = scalar_select 0, %s7, %s5
  $region1: #{encoder_pallas.6} parent=0
    #allocation2 [shape = 'u8[8192]{0}', space=vmem, size = 0x2000, scoped, tag = 'input window, operand 0, single buffered']
    #allocation3 [shape = 's32[1]{0}', space=sflag, size = 0x4, scoped, tag = 'scoped memory for encoder_pallas.6']
    #allocation4 [shape = 'u8[16384]{0}', space=vmem, size = 0x4000, scoped, tag = 'input window, operand 1, single buffered']
    #allocation5 [shape = 's32[1]{0}', space=sflag, size = 0x4, scoped, tag = 'scoped memory for encoder_pallas.6']
    %9 = vsyncpa [#allocation3], 0
    %10 = vsyncpa [#allocation5], 0
    // Predicated region
    $region2: #{encoder_pallas.6} parent=1 // pred_check
      _
    $region3: #{encoder_pallas.6} parent=1 // pred_check_branch
      %12 = sbr.rel (0) target = $region5
    $region4: #{encoder_pallas.6} parent=1 // pred_region
      %14 = vsyncadd [#allocation3], 0
      %s15 = sshll.u32 %s0, 4
      %s16 = int_to_ptr.hbm [resolvable:$true] %s15
      %s17 = sshll.u32 [#allocation2], 4
      %s18 = int_to_ptr.vmem [resolvable:$true] %s17
      %23 = dma.hbm_to_vmem [thread:$0]  %s16, 256, %s18, [#allocation3], 128, 128, 8
    $region5: #{encoder_pallas.6} parent=1 // pred_fallthru
      _
    // Predicated region
    $region6: #{encoder_pallas.6} parent=1 // pred_check
      _
    $region7: #{encoder_pallas.6} parent=1 // pred_check_branch
      %25 = sbr.rel (0) target = $region9
    $region8: #{encoder_pallas.6} parent=1 // pred_region
      %27 = vsyncadd [#allocation5], 0
      %s28 = sshll.u32 %s1, 4
      %s29 = int_to_ptr.hbm [resolvable:$true] %s28
      %s30 = sshll.u32 [#allocation4], 4
      %s31 = int_to_ptr.vmem [resolvable:$true] %s30
      %36 = dma.hbm_to_vmem [thread:$0]  %s29, 512, %s31, [#allocation5], 128, 128, 8
    $region9: #{encoder_pallas.6} parent=1 // pred_fallthru
      _
    // Predicated region
    $region10: #{encoder_pallas.6} parent=1 // pred_check
      _
    $region11: #{encoder_pallas.6} parent=1 // pred_check_branch
      %38 = sbr.rel (0) target = $region13
    $region12: #{encoder_pallas.6} parent=1 // pred_region
      _
    $region13: #{encoder_pallas.6} parent=1 // pred_fallthru
      _
    // Predicated region
    $region14: #{encoder_pallas.6} parent=1 // pred_check
      _
    $region15: #{encoder_pallas.6} parent=1 // pred_check_branch
      %40 = sbr.rel (0) target = $region17
    $region16: #{encoder_pallas.6} parent=1 // pred_region
      _
    $region17: #{encoder_pallas.6} parent=1 // pred_fallthru
      _
    // Predicated region
    $region18: #{encoder_pallas.6} parent=1 // pred_check
      _
    $region19: #{encoder_pallas.6} parent=1 // pred_check_branch
      %42 = sbr.rel (0) target = $region21
    $region20: #{encoder_pallas.6} parent=1 // pred_region
      %44 = dma.done [#allocation3], 256
    $region21: #{encoder_pallas.6} parent=1 // pred_fallthru
      _
    // Predicated region
    $region22: #{encoder_pallas.6} parent=1 // pred_check
      _
    $region23: #{encoder_pallas.6} parent=1 // pred_check_branch
      %46 = sbr.rel (0) target = $region25
    $region24: #{encoder_pallas.6} parent=1 // pred_region
      %48 = dma.done [#allocation5], 512
    $region25: #{encoder_pallas.6} parent=1 // pred_fallthru
      _
    %v49 = vld [vmem:[#allocation2] sm:$0xff]
    %v50 = vld [vmem:[#allocation2 + $0x8] sm:$0xff]
    %v51 = vld [vmem:[%s3] sm:$0x1]
    %v52 = vld [vmem:[%s3 + $0x1] sm:$0x1]
    %vm53 = vcmask 261120
    %v54 = vsel %vm53, %v49, 0.0
    %55 = vadd.xlane.f32.xlu0 %v54
    %v56 = vpop.xlane.xlu0 %55
    %v57 = vsel %vm53, %v50, 0.0
    %58 = vadd.xlane.f32.xlu0 %v57
    %v59 = vpop.xlane.xlu0 %58
    %v60 = vrcp.pop 32.0
    %v61 = vmul.f32 32.0, %v60
    %v62 = vsub.f32 1.0, %v61
    %v63 = vmul.f32 %v60, %v62
    %v64 = vadd.f32 %v60, %v63
    %vm65 = vweird.f32 %v60
    %v66 = vsel %vm65, %v60, %v64
    %v67 = vmul.f32 %v56, %v66
    %v68 = vmul.f32 %v59, %v66
    %v69 = vsub.f32 %v49, %v67
    %v70 = vsub.f32 %v50, %v68
    %v71 = vmul.f32 %v69, %v69
    %v72 = vmul.f32 %v70, %v70
    %v73 = vsel %vm53, %v71, 0.0
    %74 = vadd.xlane.f32.xlu0 %v73
    %v75 = vpop.xlane.xlu0 %74
    %v76 = vsel %vm53, %v72, 0.0
    %77 = vadd.xlane.f32.xlu0 %v76
    %v78 = vpop.xlane.xlu0 %77
    %v79 = vmul.f32 %v75, %v66
    %v80 = vmul.f32 %v78, %v66
    %v81 = vadd.f32 %v79, 1e-05
    %v82 = vadd.f32 %v80, 1e-05
    %v83 = vrsqrt.pop %v81
    %v84 = vmul.f32 %v83, %v81
    %v85 = vmul.f32 %v84, %v83
    %v86 = vmul.f32 0.5, %v85
    %v87 = vsub.f32 1.5, %v86
    %v88 = vmul.f32 %v83, %v87
    %vm89 = vweird.f32 %v81
    %vm90 = vweird.f32 %v83
    %vm91 = vmor %vm89, %vm90
    %v92 = vsel %vm91, %v83, %v88
    %v93 = vrsqrt.pop %v82
    %v94 = vmul.f32 %v93, %v82
    %v95 = vmul.f32 %v94, %v93
    %v96 = vmul.f32 0.5, %v95
    %v97 = vsub.f32 1.5, %v96
    %v98 = vmul.f32 %v93, %v97
    %vm99 = vweird.f32 %v82
    %vm100 = vweird.f32 %v93
    %vm101 = vmor %vm99, %vm100
    %v102 = vsel %vm101, %v93, %v98
    %v103 = vmul.f32 %v69, %v92
    %v104 = vmul.f32 %v70, %v102
    %v105 = vperm.slane %v51, 0
    %v106 = vmul.f32 %v103, %v105
    %v107 = vmul.f32 %v104, %v105
    %v108 = vperm.slane %v52, 0
    %v109 = vadd.f32 %v106, %v108
    %v110 = vadd.f32 %v107, %v108
    %v111 = vld [vmem:[#allocation4] sm:$0xff]
    %v112 = vld [vmem:[#allocation4 + $0x8] sm:$0xff]
    %v113 = vld [vmem:[#allocation4 + $0x10] sm:$0xff]
    %v114 = vld [vmem:[#allocation4 + $0x18] sm:$0xff]
    %v115 = vld [vmem:[%s2] sm:$0x1]
    %v117 = vperm.slane %v115, 0
    %v120 = vsel %vm53, %v109, 0
    %v123 = vsel %vm53, %v110, 0
    %125 = vmatpush.msra.mxu0 0.0
    %126 = vmatpush.msra.mxu0 0.0
    %127 = vmatpush.msra.mxu0 0.0
    %128 = vmatpush.msra.mxu0 0.0
    %129 = vmatpush.msra.mxu0 0.0
    %130 = vmatpush.msra.mxu0 0.0
    %131 = vmatpush.msra.mxu0 0.0
    %132 = vmatpush.msra.mxu0 0.0
    %133 = vmatpush.msra.mxu0 0.0
    %134 = vmatpush.msra.mxu0 0.0
    %135 = vmatpush.msra.mxu0 0.0
    %136 = vmatpush.msra.mxu0 0.0
    %137 = vmatpush.msra.mxu0 %v114
    %138 = vmatpush.msra.mxu0 %v113
    %139 = vmatpush.msra.mxu0 %v112
    %140 = vmatpush.msra.mxu0 %v111
    %141 = vmatmul.f32.gmra.mxu0 %v120
    %v142 = vpop.f32.mrf.mxu0
    %v143 = vadd.f32 %v117, %v142
    %144 = vmatmul.f32.gmra.mxu0 %v123
    %v145 = vpop.f32.mrf.mxu0
    %v146 = vadd.f32 %v117, %v145
    %147 = vdwg.mxu0
    %vm148 = vcmask 785408
    %149 = vst.msk [vmem:[%s4] sm:$0xff] %vm148, %v143
    %150 = vst.msk [vmem:[%s4 + $0x8] sm:$0xff] %vm148, %v146
    // Predicated region
    $region26: #{encoder_pallas.6} parent=1 // pred_check
      _
    $region27: #{encoder_pallas.6} parent=1 // pred_check_branch
      %152 = sbr.rel (0) target = $region29
    $region28: #{encoder_pallas.6} parent=1 // pred_region
      _
    $region29: #{encoder_pallas.6} parent=1 // pred_fallthru
      _
    // Predicated region
    $region30: #{encoder_pallas.6} parent=1 // pred_check
      _
    $region31: #{encoder_pallas.6} parent=1 // pred_check_branch
      %154 = sbr.rel (0) target = $region33
    $region32: #{encoder_pallas.6} parent=1 // pred_region
      _
    $region33: #{encoder_pallas.6} parent=1 // pred_fallthru
      _
    %155 = vsyncpa [#allocation3], 1
    %156 = vsyncpa [#allocation5], 1

// kernel: encoder_pallas.8
$region0: #{encoder_pallas.8}
  #allocation0 [shape = 'u32[]', space=smem, size = 0x4, offset = 0x4, fixed_abs, tag = 'smem constant byte address 0x4 - core index']
  #allocation1 [shape = 'u32[72,128]{1,0:T(1,128)}', space=vmem, size = 0x9000, scoped, tag = 'internal scratch']
  %s0 = inlined_call_operand.vmem [shape: f32[16,32], index: 0, kind: input, shape index: {}]
  %s1 = inlined_call_operand.vmem [shape: f32[16,32], index: 1, kind: input, shape index: {}]
  %s2 = inlined_call_operand.vmem [shape: f32[32,32], index: 2, kind: input, shape index: {}]
  %s3 = inlined_call_operand.vmem [shape: f32[1,32], index: 3, kind: input, shape index: {}]
  %s4 = inlined_call_operand.vmem [shape: f32[32,64], index: 4, kind: input, shape index: {}]
  %s5 = inlined_call_operand.vmem [shape: f32[1,64], index: 5, kind: input, shape index: {}]
  %s6 = inlined_call_operand.vmem [shape: f32[64,32], index: 6, kind: input, shape index: {}]
  %s7 = inlined_call_operand.vmem [shape: f32[1,32], index: 7, kind: input, shape index: {}]
  %s8 = inlined_call_operand.vmem [shape: f32[2,32], index: 8, kind: input, shape index: {}]
  %s9 = inlined_call_operand.vmem [shape: f32[16,32], index: 9, kind: output, shape index: {}]
  %s10 = sld [smem:[#allocation0]]
  $region46: #{encoder_pallas.8} parent=0
    _
  %s12 = ssub.s32 1, %s10
  %s13 = scalar_select 0, %s12, %s10
  // Predicated region
  $region2: #{encoder_pallas.8} parent=0 // pred_check
    _
  $region3: #{encoder_pallas.8} parent=0 // pred_check_branch
    %15 = sbr.rel (0) target = $region5
  $region4: #{encoder_pallas.8} parent=0 // pred_region
    _
  $region5: #{encoder_pallas.8} parent=0 // pred_fallthru
    _
  // Predicated region
  $region6: #{encoder_pallas.8} parent=0 // pred_check
    _
  $region7: #{encoder_pallas.8} parent=0 // pred_check_branch
    %17 = sbr.rel (0) target = $region9
  $region8: #{encoder_pallas.8} parent=0 // pred_region
    _
  $region9: #{encoder_pallas.8} parent=0 // pred_fallthru
    _
  // Predicated region
  $region10: #{encoder_pallas.8} parent=0 // pred_check
    _
  $region11: #{encoder_pallas.8} parent=0 // pred_check_branch
    %19 = sbr.rel (0) target = $region13
  $region12: #{encoder_pallas.8} parent=0 // pred_region
    _
  $region13: #{encoder_pallas.8} parent=0 // pred_fallthru
    _
  // Predicated region
  $region14: #{encoder_pallas.8} parent=0 // pred_check
    _
  $region15: #{encoder_pallas.8} parent=0 // pred_check_branch
    %21 = sbr.rel (0) target = $region17
  $region16: #{encoder_pallas.8} parent=0 // pred_region
    _
  $region17: #{encoder_pallas.8} parent=0 // pred_fallthru
    _
  // Predicated region
  $region18: #{encoder_pallas.8} parent=0 // pred_check
    _
  $region19: #{encoder_pallas.8} parent=0 // pred_check_branch
    %23 = sbr.rel (0) target = $region21
  $region20: #{encoder_pallas.8} parent=0 // pred_region
    _
  $region21: #{encoder_pallas.8} parent=0 // pred_fallthru
    _
  // Predicated region
  $region22: #{encoder_pallas.8} parent=0 // pred_check
    _
  $region23: #{encoder_pallas.8} parent=0 // pred_check_branch
    %25 = sbr.rel (0) target = $region25
  $region24: #{encoder_pallas.8} parent=0 // pred_region
    _
  $region25: #{encoder_pallas.8} parent=0 // pred_fallthru
    _
  // Predicated region
  $region26: #{encoder_pallas.8} parent=0 // pred_check
    _
  $region27: #{encoder_pallas.8} parent=0 // pred_check_branch
    %27 = sbr.rel (0) target = $region29
  $region28: #{encoder_pallas.8} parent=0 // pred_region
    _
  $region29: #{encoder_pallas.8} parent=0 // pred_fallthru
    _
  // Predicated region
  $region30: #{encoder_pallas.8} parent=0 // pred_check
    _
  $region31: #{encoder_pallas.8} parent=0 // pred_check_branch
    %29 = sbr.rel (0) target = $region33
  $region32: #{encoder_pallas.8} parent=0 // pred_region
    _
  $region33: #{encoder_pallas.8} parent=0 // pred_fallthru
    _
  // Predicated region
  $region34: #{encoder_pallas.8} parent=0 // pred_check
    _
  $region35: #{encoder_pallas.8} parent=0 // pred_check_branch
    %31 = sbr.rel (0) target = $region37
  $region36: #{encoder_pallas.8} parent=0 // pred_region
    _
  $region37: #{encoder_pallas.8} parent=0 // pred_fallthru
    _
  %v32 = vld [vmem:[%s0] sm:$0xff]
  %v33 = vld [vmem:[%s0 + $0x8] sm:$0xff]
  %v34 = vld [vmem:[%s1] sm:$0xff]
  %v35 = vld [vmem:[%s1 + $0x8] sm:$0xff]
  %v36 = vld [vmem:[%s2] sm:$0xff]
  %v37 = vld [vmem:[%s2 + $0x8] sm:$0xff]
  %v38 = vld [vmem:[%s2 + $0x10] sm:$0xff]
  %v39 = vld [vmem:[%s2 + $0x18] sm:$0xff]
  %vm40 = vcmask 261120
  %v42 = vsel %vm40, %v34, 0
  %v45 = vsel %vm40, %v35, 0
  %47 = vmatpush.msra.mxu0 0.0
  %48 = vmatpush.msra.mxu0 0.0
  %49 = vmatpush.msra.mxu0 0.0
  %50 = vmatpush.msra.mxu0 0.0
  %51 = vmatpush.msra.mxu0 0.0
  %52 = vmatpush.msra.mxu0 0.0
  %53 = vmatpush.msra.mxu0 0.0
  %54 = vmatpush.msra.mxu0 0.0
  %55 = vmatpush.msra.mxu0 0.0
  %56 = vmatpush.msra.mxu0 0.0
  %57 = vmatpush.msra.mxu0 0.0
  %58 = vmatpush.msra.mxu0 0.0
  %59 = vmatpush.msra.mxu0 %v39
  %60 = vmatpush.msra.mxu0 %v38
  %61 = vmatpush.msra.mxu0 %v37
  %62 = vmatpush.msra.mxu0 %v36
  %63 = vmatmul.f32.gmra.mxu0 %v42
  %v64 = vpop.f32.mrf.mxu0
  %v65 = vadd.f32 0.0, %v64
  %66 = vmatmul.f32.gmra.mxu0 %v45
  %v67 = vpop.f32.mrf.mxu0
  %v68 = vadd.f32 0.0, %v67
  %69 = vdwg.mxu0
  %v70 = vadd.f32 %v32, %v65
  %v71 = vadd.f32 %v33, %v68
  %v72 = vld [vmem:[%s3] sm:$0x1]
  %v74 = vperm.slane %v72, 0
  %v76 = vadd.f32 %v70, %v74
  %v77 = vadd.f32 %v71, %v74
  %v78 = vld [vmem:[%s8] sm:$0x1]
  %v79 = vld [vmem:[%s8 + $0x1] sm:$0x1]
  %v80 = vsel %vm40, %v76, 0.0
  %81 = vadd.xlane.f32.xlu0 %v80
  %v82 = vpop.xlane.xlu0 %81
  %v83 = vsel %vm40, %v77, 0.0
  %84 = vadd.xlane.f32.xlu0 %v83
  %v85 = vpop.xlane.xlu0 %84
  %v86 = vrcp.pop 32.0
  %v87 = vmul.f32 32.0, %v86
  %v88 = vsub.f32 1.0, %v87
  %v89 = vmul.f32 %v86, %v88
  %v90 = vadd.f32 %v86, %v89
  %vm91 = vweird.f32 %v86
  %v92 = vsel %vm91, %v86, %v90
  %v93 = vmul.f32 %v82, %v92
  %v94 = vmul.f32 %v85, %v92
  %v95 = vsub.f32 %v76, %v93
  %v96 = vsub.f32 %v77, %v94
  %v97 = vmul.f32 %v95, %v95
  %v98 = vmul.f32 %v96, %v96
  %v99 = vsel %vm40, %v97, 0.0
  %100 = vadd.xlane.f32.xlu0 %v99
  %v101 = vpop.xlane.xlu0 %100
  %v102 = vsel %vm40, %v98, 0.0
  %103 = vadd.xlane.f32.xlu0 %v102
  %v104 = vpop.xlane.xlu0 %103
  %v105 = vmul.f32 %v101, %v92
  %v106 = vmul.f32 %v104, %v92
  %v107 = vadd.f32 %v105, 1e-05
  %v108 = vadd.f32 %v106, 1e-05
  %v109 = vrsqrt.pop %v107
  %v110 = vmul.f32 %v109, %v107
  %v111 = vmul.f32 %v110, %v109
  %v112 = vmul.f32 0.5, %v111
  %v113 = vsub.f32 1.5, %v112
  %v114 = vmul.f32 %v109, %v113
  %vm115 = vweird.f32 %v107
  %vm116 = vweird.f32 %v109
  %vm117 = vmor %vm115, %vm116
  %v118 = vsel %vm117, %v109, %v114
  %v119 = vrsqrt.pop %v108
  %v120 = vmul.f32 %v119, %v108
  %v121 = vmul.f32 %v120, %v119
  %v122 = vmul.f32 0.5, %v121
  %v123 = vsub.f32 1.5, %v122
  %v124 = vmul.f32 %v119, %v123
  %vm125 = vweird.f32 %v108
  %vm126 = vweird.f32 %v119
  %vm127 = vmor %vm125, %vm126
  %v128 = vsel %vm127, %v119, %v124
  %v129 = vmul.f32 %v95, %v118
  %v130 = vmul.f32 %v96, %v128
  %v131 = vperm.slane %v78, 0
  %v132 = vmul.f32 %v129, %v131
  %v133 = vmul.f32 %v130, %v131
  %v134 = vperm.slane %v79, 0
  %v135 = vadd.f32 %v132, %v134
  %v136 = vadd.f32 %v133, %v134
  %v137 = vld [vmem:[%s4] sm:$0xff]
  %v138 = vld [vmem:[%s4 + $0x8] sm:$0xff]
  %v139 = vld [vmem:[%s4 + $0x10] sm:$0xff]
  %v140 = vld [vmem:[%s4 + $0x18] sm:$0xff]
  %v141 = vld [vmem:[%s5] sm:$0x1]
  %v143 = vperm.slane %v141, 0
  %v146 = vsel %vm40, %v135, 0
  %v149 = vsel %vm40, %v136, 0
  %151 = vmatpush.msra.mxu0 0.0
  %152 = vmatpush.msra.mxu0 0.0
  %153 = vmatpush.msra.mxu0 0.0
  %154 = vmatpush.msra.mxu0 0.0
  %155 = vmatpush.msra.mxu0 0.0
  %156 = vmatpush.msra.mxu0 0.0
  %157 = vmatpush.msra.mxu0 0.0
  %158 = vmatpush.msra.mxu0 0.0
  %159 = vmatpush.msra.mxu0 0.0
  %160 = vmatpush.msra.mxu0 0.0
  %161 = vmatpush.msra.mxu0 0.0
  %162 = vmatpush.msra.mxu0 0.0
  %163 = vmatpush.msra.mxu0 %v140
  %164 = vmatpush.msra.mxu0 %v139
  %165 = vmatpush.msra.mxu0 %v138
  %166 = vmatpush.msra.mxu0 %v137
  %167 = vmatmul.f32.gmra.mxu0 %v146
  %v168 = vpop.f32.mrf.mxu0
  %v169 = vadd.f32 %v143, %v168
  %170 = vmatmul.f32.gmra.mxu0 %v149
  %v171 = vpop.f32.mrf.mxu0
  %v172 = vadd.f32 %v143, %v171
  %173 = vdwg.mxu0
  %v174 = vmax.f32 %v169, 0.0
  %v175 = vmax.f32 %v172, 0.0
  %v176 = vld [vmem:[%s6] sm:$0xff]
  %v177 = vld [vmem:[%s6 + $0x8] sm:$0xff]
  %v178 = vld [vmem:[%s6 + $0x10] sm:$0xff]
  %v179 = vld [vmem:[%s6 + $0x18] sm:$0xff]
  %v180 = vld [vmem:[%s6 + $0x20] sm:$0xff]
  %v181 = vld [vmem:[%s6 + $0x28] sm:$0xff]
  %v182 = vld [vmem:[%s6 + $0x30] sm:$0xff]
  %v183 = vld [vmem:[%s6 + $0x38] sm:$0xff]
  %v184 = vld [vmem:[%s7] sm:$0x1]
  %v186 = vperm.slane %v184, 0
  %vm188 = vcmask 523264
  %v190 = vsel %vm188, %v174, 0
  %v193 = vsel %vm188, %v175, 0
  %195 = vmatpush.msra.mxu0 0.0
  %196 = vmatpush.msra.mxu0 0.0
  %197 = vmatpush.msra.mxu0 0.0
  %198 = vmatpush.msra.mxu0 0.0
  %199 = vmatpush.msra.mxu0 0.0
  %200 = vmatpush.msra.mxu0 0.0
  %201 = vmatpush.msra.mxu0 0.0
  %202 = vmatpush.msra.mxu0 0.0
  %203 = vmatpush.msra.mxu0 %v183
  %204 = vmatpush.msra.mxu0 %v182
  %205 = vmatpush.msra.mxu0 %v181
  %206 = vmatpush.msra.mxu0 %v180
  %207 = vmatpush.msra.mxu0 %v179
  %208 = vmatpush.msra.mxu0 %v178
  %209 = vmatpush.msra.mxu0 %v177
  %210 = vmatpush.msra.mxu0 %v176
  %211 = vmatmul.f32.gmra.mxu0 %v190
  %v212 = vpop.f32.mrf.mxu0
  %v213 = vadd.f32 %v186, %v212
  %214 = vmatmul.f32.gmra.mxu0 %v193
  %v215 = vpop.f32.mrf.mxu0
  %v216 = vadd.f32 %v186, %v215
  %217 = vdwg.mxu0
  %v218 = vadd.f32 %v76, %v213
  %v219 = vadd.f32 %v77, %v216
  %220 = vst.msk [vmem:[%s9] sm:$0xff] %vm40, %v218
  %221 = vst.msk [vmem:[%s9 + $0x8] sm:$0xff] %vm40, %v219
  // Predicated region
  $region38: #{encoder_pallas.8} parent=0 // pred_check
    _
  $region39: #{encoder_pallas.8} parent=0 // pred_check_branch
    %223 = sbr.rel (0) target = $region41
  $region40: #{encoder_pallas.8} parent=0 // pred_region
    _
  $region41: #{encoder_pallas.8} parent=0 // pred_fallthru
    _
  // Predicated region
  $region42: #{encoder_pallas.8} parent=0 // pred_check
    _
  $region43: #{encoder_pallas.8} parent=0 // pred_check_branch
    %225 = sbr.rel (0) target = $region45
  $region44: #{encoder_pallas.8} parent=0 // pred_region
    _
  $region45: #{encoder_pallas.8} parent=0 // pred_fallthru
    _

// kernel: encoder_pallas.11
$region0: #{encoder_pallas.11}
  #allocation0 [shape = 'u32[]', space=smem, size = 0x4, offset = 0x4, fixed_abs, tag = 'smem constant byte address 0x4 - core index']
  #allocation1 [shape = 'u32[72,128]{1,0:T(1,128)}', space=vmem, size = 0x9000, scoped, tag = 'internal scratch']
  %s0 = inlined_call_operand.vmem [shape: f32[16,32], index: 0, kind: input, shape index: {}]
  %s1 = inlined_call_operand.vmem [shape: f32[16,32], index: 1, kind: input, shape index: {}]
  %s2 = inlined_call_operand.vmem [shape: f32[32,32], index: 2, kind: input, shape index: {}]
  %s3 = inlined_call_operand.vmem [shape: f32[1,32], index: 3, kind: input, shape index: {}]
  %s4 = inlined_call_operand.vmem [shape: f32[32,64], index: 4, kind: input, shape index: {}]
  %s5 = inlined_call_operand.vmem [shape: f32[1,64], index: 5, kind: input, shape index: {}]
  %s6 = inlined_call_operand.vmem [shape: f32[64,32], index: 6, kind: input, shape index: {}]
  %s7 = inlined_call_operand.vmem [shape: f32[1,32], index: 7, kind: input, shape index: {}]
  %s8 = inlined_call_operand.vmem [shape: f32[2,32], index: 8, kind: input, shape index: {}]
  %s9 = inlined_call_operand.hbm [shape: f32[16,32], index: 9, kind: output, shape index: {}]
  %s10 = sld [smem:[#allocation0]]
  $region46: #{encoder_pallas.11} parent=0
    _
  %s12 = ssub.s32 1, %s10
  %s13 = scalar_select 0, %s12, %s10
  $region1: #{encoder_pallas.11} parent=0
    #allocation2 [shape = 'u8[8192]{0}', space=vmem, size = 0x2000, scoped, tag = 'output window, operand 0, single buffered']
    #allocation3 [shape = 's32[1]{0}', space=sflag, size = 0x4, scoped, tag = 'scoped memory for encoder_pallas.11']
    %14 = vsyncpa [#allocation3], 0
    // Predicated region
    $region2: #{encoder_pallas.11} parent=1 // pred_check
      _
    $region3: #{encoder_pallas.11} parent=1 // pred_check_branch
      %16 = sbr.rel (0) target = $region5
    $region4: #{encoder_pallas.11} parent=1 // pred_region
      _
    $region5: #{encoder_pallas.11} parent=1 // pred_fallthru
      _
    // Predicated region
    $region6: #{encoder_pallas.11} parent=1 // pred_check
      _
    $region7: #{encoder_pallas.11} parent=1 // pred_check_branch
      %18 = sbr.rel (0) target = $region9
    $region8: #{encoder_pallas.11} parent=1 // pred_region
      _
    $region9: #{encoder_pallas.11} parent=1 // pred_fallthru
      _
    // Predicated region
    $region10: #{encoder_pallas.11} parent=1 // pred_check
      _
    $region11: #{encoder_pallas.11} parent=1 // pred_check_branch
      %20 = sbr.rel (0) target = $region13
    $region12: #{encoder_pallas.11} parent=1 // pred_region
      _
    $region13: #{encoder_pallas.11} parent=1 // pred_fallthru
      _
    // Predicated region
    $region14: #{encoder_pallas.11} parent=1 // pred_check
      _
    $region15: #{encoder_pallas.11} parent=1 // pred_check_branch
      %22 = sbr.rel (0) target = $region17
    $region16: #{encoder_pallas.11} parent=1 // pred_region
      _
    $region17: #{encoder_pallas.11} parent=1 // pred_fallthru
      _
    // Predicated region
    $region18: #{encoder_pallas.11} parent=1 // pred_check
      _
    $region19: #{encoder_pallas.11} parent=1 // pred_check_branch
      %24 = sbr.rel (0) target = $region21
    $region20: #{encoder_pallas.11} parent=1 // pred_region
      _
    $region21: #{encoder_pallas.11} parent=1 // pred_fallthru
      _
    // Predicated region
    $region22: #{encoder_pallas.11} parent=1 // pred_check
      _
    $region23: #{encoder_pallas.11} parent=1 // pred_check_branch
      %26 = sbr.rel (0) target = $region25
    $region24: #{encoder_pallas.11} parent=1 // pred_region
      _
    $region25: #{encoder_pallas.11} parent=1 // pred_fallthru
      _
    // Predicated region
    $region26: #{encoder_pallas.11} parent=1 // pred_check
      _
    $region27: #{encoder_pallas.11} parent=1 // pred_check_branch
      %28 = sbr.rel (0) target = $region29
    $region28: #{encoder_pallas.11} parent=1 // pred_region
      _
    $region29: #{encoder_pallas.11} parent=1 // pred_fallthru
      _
    // Predicated region
    $region30: #{encoder_pallas.11} parent=1 // pred_check
      _
    $region31: #{encoder_pallas.11} parent=1 // pred_check_branch
      %30 = sbr.rel (0) target = $region33
    $region32: #{encoder_pallas.11} parent=1 // pred_region
      _
    $region33: #{encoder_pallas.11} parent=1 // pred_fallthru
      _
    // Predicated region
    $region34: #{encoder_pallas.11} parent=1 // pred_check
      _
    $region35: #{encoder_pallas.11} parent=1 // pred_check_branch
      %32 = sbr.rel (0) target = $region37
    $region36: #{encoder_pallas.11} parent=1 // pred_region
      _
    $region37: #{encoder_pallas.11} parent=1 // pred_fallthru
      _
    %v33 = vld [vmem:[%s0] sm:$0xff]
    %v34 = vld [vmem:[%s0 + $0x8] sm:$0xff]
    %v35 = vld [vmem:[%s1] sm:$0xff]
    %v36 = vld [vmem:[%s1 + $0x8] sm:$0xff]
    %v37 = vld [vmem:[%s2] sm:$0xff]
    %v38 = vld [vmem:[%s2 + $0x8] sm:$0xff]
    %v39 = vld [vmem:[%s2 + $0x10] sm:$0xff]
    %v40 = vld [vmem:[%s2 + $0x18] sm:$0xff]
    %vm41 = vcmask 261120
    %v43 = vsel %vm41, %v35, 0
    %v46 = vsel %vm41, %v36, 0
    %48 = vmatpush.msra.mxu0 0.0
    %49 = vmatpush.msra.mxu0 0.0
    %50 = vmatpush.msra.mxu0 0.0
    %51 = vmatpush.msra.mxu0 0.0
    %52 = vmatpush.msra.mxu0 0.0
    %53 = vmatpush.msra.mxu0 0.0
    %54 = vmatpush.msra.mxu0 0.0
    %55 = vmatpush.msra.mxu0 0.0
    %56 = vmatpush.msra.mxu0 0.0
    %57 = vmatpush.msra.mxu0 0.0
    %58 = vmatpush.msra.mxu0 0.0
    %59 = vmatpush.msra.mxu0 0.0
    %60 = vmatpush.msra.mxu0 %v40
    %61 = vmatpush.msra.mxu0 %v39
    %62 = vmatpush.msra.mxu0 %v38
    %63 = vmatpush.msra.mxu0 %v37
    %64 = vmatmul.f32.gmra.mxu0 %v43
    %v65 = vpop.f32.mrf.mxu0
    %v66 = vadd.f32 0.0, %v65
    %67 = vmatmul.f32.gmra.mxu0 %v46
    %v68 = vpop.f32.mrf.mxu0
    %v69 = vadd.f32 0.0, %v68
    %70 = vdwg.mxu0
    %v71 = vadd.f32 %v33, %v66
    %v72 = vadd.f32 %v34, %v69
    %v73 = vld [vmem:[%s3] sm:$0x1]
    %v75 = vperm.slane %v73, 0
    %v77 = vadd.f32 %v71, %v75
    %v78 = vadd.f32 %v72, %v75
    %v79 = vld [vmem:[%s8] sm:$0x1]
    %v80 = vld [vmem:[%s8 + $0x1] sm:$0x1]
    %v81 = vsel %vm41, %v77, 0.0
    %82 = vadd.xlane.f32.xlu0 %v81
    %v83 = vpop.xlane.xlu0 %82
    %v84 = vsel %vm41, %v78, 0.0
    %85 = vadd.xlane.f32.xlu0 %v84
    %v86 = vpop.xlane.xlu0 %85
    %v87 = vrcp.pop 32.0
    %v88 = vmul.f32 32.0, %v87
    %v89 = vsub.f32 1.0, %v88
    %v90 = vmul.f32 %v87, %v89
    %v91 = vadd.f32 %v87, %v90
    %vm92 = vweird.f32 %v87
    %v93 = vsel %vm92, %v87, %v91
    %v94 = vmul.f32 %v83, %v93
    %v95 = vmul.f32 %v86, %v93
    %v96 = vsub.f32 %v77, %v94
    %v97 = vsub.f32 %v78, %v95
    %v98 = vmul.f32 %v96, %v96
    %v99 = vmul.f32 %v97, %v97
    %v100 = vsel %vm41, %v98, 0.0
    %101 = vadd.xlane.f32.xlu0 %v100
    %v102 = vpop.xlane.xlu0 %101
    %v103 = vsel %vm41, %v99, 0.0
    %104 = vadd.xlane.f32.xlu0 %v103
    %v105 = vpop.xlane.xlu0 %104
    %v106 = vmul.f32 %v102, %v93
    %v107 = vmul.f32 %v105, %v93
    %v108 = vadd.f32 %v106, 1e-05
    %v109 = vadd.f32 %v107, 1e-05
    %v110 = vrsqrt.pop %v108
    %v111 = vmul.f32 %v110, %v108
    %v112 = vmul.f32 %v111, %v110
    %v113 = vmul.f32 0.5, %v112
    %v114 = vsub.f32 1.5, %v113
    %v115 = vmul.f32 %v110, %v114
    %vm116 = vweird.f32 %v108
    %vm117 = vweird.f32 %v110
    %vm118 = vmor %vm116, %vm117
    %v119 = vsel %vm118, %v110, %v115
    %v120 = vrsqrt.pop %v109
    %v121 = vmul.f32 %v120, %v109
    %v122 = vmul.f32 %v121, %v120
    %v123 = vmul.f32 0.5, %v122
    %v124 = vsub.f32 1.5, %v123
    %v125 = vmul.f32 %v120, %v124
    %vm126 = vweird.f32 %v109
    %vm127 = vweird.f32 %v120
    %vm128 = vmor %vm126, %vm127
    %v129 = vsel %vm128, %v120, %v125
    %v130 = vmul.f32 %v96, %v119
    %v131 = vmul.f32 %v97, %v129
    %v132 = vperm.slane %v79, 0
    %v133 = vmul.f32 %v130, %v132
    %v134 = vmul.f32 %v131, %v132
    %v135 = vperm.slane %v80, 0
    %v136 = vadd.f32 %v133, %v135
    %v137 = vadd.f32 %v134, %v135
    %v138 = vld [vmem:[%s4] sm:$0xff]
    %v139 = vld [vmem:[%s4 + $0x8] sm:$0xff]
    %v140 = vld [vmem:[%s4 + $0x10] sm:$0xff]
    %v141 = vld [vmem:[%s4 + $0x18] sm:$0xff]
    %v142 = vld [vmem:[%s5] sm:$0x1]
    %v144 = vperm.slane %v142, 0
    %v147 = vsel %vm41, %v136, 0
    %v150 = vsel %vm41, %v137, 0
    %152 = vmatpush.msra.mxu0 0.0
    %153 = vmatpush.msra.mxu0 0.0
    %154 = vmatpush.msra.mxu0 0.0
    %155 = vmatpush.msra.mxu0 0.0
    %156 = vmatpush.msra.mxu0 0.0
    %157 = vmatpush.msra.mxu0 0.0
    %158 = vmatpush.msra.mxu0 0.0
    %159 = vmatpush.msra.mxu0 0.0
    %160 = vmatpush.msra.mxu0 0.0
    %161 = vmatpush.msra.mxu0 0.0
    %162 = vmatpush.msra.mxu0 0.0
    %163 = vmatpush.msra.mxu0 0.0
    %164 = vmatpush.msra.mxu0 %v141
    %165 = vmatpush.msra.mxu0 %v140
    %166 = vmatpush.msra.mxu0 %v139
    %167 = vmatpush.msra.mxu0 %v138
    %168 = vmatmul.f32.gmra.mxu0 %v147
    %v169 = vpop.f32.mrf.mxu0
    %v170 = vadd.f32 %v144, %v169
    %171 = vmatmul.f32.gmra.mxu0 %v150
    %v172 = vpop.f32.mrf.mxu0
    %v173 = vadd.f32 %v144, %v172
    %174 = vdwg.mxu0
    %v175 = vmax.f32 %v170, 0.0
    %v176 = vmax.f32 %v173, 0.0
    %v177 = vld [vmem:[%s6] sm:$0xff]
    %v178 = vld [vmem:[%s6 + $0x8] sm:$0xff]
    %v179 = vld [vmem:[%s6 + $0x10] sm:$0xff]
    %v180 = vld [vmem:[%s6 + $0x18] sm:$0xff]
    %v181 = vld [vmem:[%s6 + $0x20] sm:$0xff]
    %v182 = vld [vmem:[%s6 + $0x28] sm:$0xff]
    %v183 = vld [vmem:[%s6 + $0x30] sm:$0xff]
    %v184 = vld [vmem:[%s6 + $0x38] sm:$0xff]
    %v185 = vld [vmem:[%s7] sm:$0x1]
    %v187 = vperm.slane %v185, 0
    %vm189 = vcmask 523264
    %v191 = vsel %vm189, %v175, 0
    %v194 = vsel %vm189, %v176, 0
    %196 = vmatpush.msra.mxu0 0.0
    %197 = vmatpush.msra.mxu0 0.0
    %198 = vmatpush.msra.mxu0 0.0
    %199 = vmatpush.msra.mxu0 0.0
    %200 = vmatpush.msra.mxu0 0.0
    %201 = vmatpush.msra.mxu0 0.0
    %202 = vmatpush.msra.mxu0 0.0
    %203 = vmatpush.msra.mxu0 0.0
    %204 = vmatpush.msra.mxu0 %v184
    %205 = vmatpush.msra.mxu0 %v183
    %206 = vmatpush.msra.mxu0 %v182
    %207 = vmatpush.msra.mxu0 %v181
    %208 = vmatpush.msra.mxu0 %v180
    %209 = vmatpush.msra.mxu0 %v179
    %210 = vmatpush.msra.mxu0 %v178
    %211 = vmatpush.msra.mxu0 %v177
    %212 = vmatmul.f32.gmra.mxu0 %v191
    %v213 = vpop.f32.mrf.mxu0
    %v214 = vadd.f32 %v187, %v213
    %215 = vmatmul.f32.gmra.mxu0 %v194
    %v216 = vpop.f32.mrf.mxu0
    %v217 = vadd.f32 %v187, %v216
    %218 = vdwg.mxu0
    %v219 = vadd.f32 %v77, %v214
    %v220 = vadd.f32 %v78, %v217
    %221 = vst.msk [vmem:[#allocation2] sm:$0xff] %vm41, %v219
    %222 = vst.msk [vmem:[#allocation2 + $0x8] sm:$0xff] %vm41, %v220
    // Predicated region
    $region38: #{encoder_pallas.11} parent=1 // pred_check
      _
    $region39: #{encoder_pallas.11} parent=1 // pred_check_branch
      %224 = sbr.rel (0) target = $region41
    $region40: #{encoder_pallas.11} parent=1 // pred_region
      %226 = vsyncadd [#allocation3], 0
      %s227 = sshll.u32 [#allocation2], 4
      %s228 = int_to_ptr.vmem [resolvable:$true] %s227
      %s229 = sshll.u32 %s9, 4
      %s230 = int_to_ptr.hbm [resolvable:$true] %s229
      %235 = dma.vmem_to_hbm [thread:$0]  %s228, 256, %s230, [#allocation3], 128, 128, 8
    $region41: #{encoder_pallas.11} parent=1 // pred_fallthru
      _
    // Predicated region
    $region42: #{encoder_pallas.11} parent=1 // pred_check
      _
    $region43: #{encoder_pallas.11} parent=1 // pred_check_branch
      %237 = sbr.rel (0) target = $region45
    $region44: #{encoder_pallas.11} parent=1 // pred_region
      %239 = dma.done [#allocation3], 256
    $region45: #{encoder_pallas.11} parent=1 // pred_fallthru
      _
    %240 = vsyncpa [#allocation3], 1

</llo_original>
